<compile_context>
chip_gen: v7x
topology: tpu7x:2x2x1
jax: 0.10.0
libtpu: 0.0.40
codegen_flags: <defaults>
</compile_context>

<pallas_src>
import numpy as np
import jax
import jax.numpy as jnp
from jax import lax
from jax.experimental import pallas as pl
from jax.experimental.pallas import tpu as pltpu

# ---------------- configuration (small, consistent with the module) ----------------
B = 2            # batch size
BP = 8           # batch padded to a full sublane tile
E = 32           # embedding_size   (300 in the original)
H = 32           # hidden_size      (256 in the original)
VOCAB = 20       # dataset.vocab_size
N_CHOICE = 4     # len(dataset.choices)
C = 5            # len(dataset.choices[name])
TP = 8           # program (token) sequence length
TT = 6           # trace length
S = TT - 1       # decode steps
EPS = 1e-5       # BatchNorm1d eps
NPAD = 128       # lane-dense padded width (== 4*H for the LSTM gates here)

assert 4 * H == NPAD and 3 * H <= NPAD and N_CHOICE * C <= NPAD and B <= BP

# -------- packed parameter-slab row layout (every block is 128 lanes wide) ---------
R_LWIH = 0                  # (E,4H)   LSTM W_ih^T
R_LWHH = R_LWIH + E         # (H,4H)   LSTM W_hh^T
R_GWCI = R_LWHH + H         # (2E,3H)p GRU W_ih^T rows for [choice_emb | index_emb]
R_GWP = R_GWCI + 2 * E      # (H,3H)p  GRU W_ih^T rows for program_emb
R_GWHH = R_GWP + H          # (H,3H)p  GRU W_hh^T
R_WINF = R_GWHH + H         # (H,N*C)p fused inference heads
R_BIAS = R_WINF + H         # 8 rows: lstm_b, gru_bih, gru_bhh, inf_b, gamma, beta, 0, 0
R_STATE = R_BIAS + BP       # (BP,128): lanes [0:H) enc h0 | [H:2H) enc c0 | [2H:3H) dec h0
PARAM_ROWS = R_STATE + BP   # = 240

# -------- packed data-slab row layout (2E = 64 lanes wide) --------------------------
D_X = 0                     # (TP*BP, 2E): lanes [0:E) program-token embeddings
D_CEI = D_X + TP * BP       # (S*BP, 2E):  lanes [0:E) choice emb | [E:2E) index emb
D_PLEN = D_CEI + S * BP     # (BP, 2E):    program lengths as f32 (0 for padded rows)
DATA_ROWS = D_PLEN + BP     # = 112
DATA_W = 2 * E              # = 64

_VMEM = pl.BlockSpec(memory_space=pltpu.MemorySpace.VMEM)


# ------------------------------- fused Pallas kernel --------------------------------
def fused_parser_kernel(param_ref, data_ref, out_ref):
    """Whole NeuralParser forward: masked LSTM encoder -> GRU decode loop -> heads."""
    f32 = jnp.float32
    steps = out_ref.shape[0] // BP - 1                 # S
    tp = data_ref.shape[0] // BP - steps - 1           # TP

    # ---- unpack the parameter slab (static, tile-aligned ref slices) ----
    lwih = param_ref[R_LWIH:R_LWIH + E, :]             # (E, 4H)
    lwhh = param_ref[R_LWHH:R_LWHH + H, :]             # (H, 4H)
    gwci = param_ref[R_GWCI:R_GWCI + 2 * E, :]         # (2E, 128)  [choice ; index]
    gwp = param_ref[R_GWP:R_GWP + H, :]                # (H, 128)
    gwhh = param_ref[R_GWHH:R_GWHH + H, :]             # (H, 128)
    winf = param_ref[R_WINF:R_WINF + H, :]             # (H, 128)
    lstm_b = param_ref[R_BIAS + 0:R_BIAS + 1, :]       # (1, 4H)
    gbih = param_ref[R_BIAS + 1:R_BIAS + 2, :]         # (1, 128)
    gbhh = param_ref[R_BIAS + 2:R_BIAS + 3, :]         # (1, 128)
    binf = param_ref[R_BIAS + 3:R_BIAS + 4, :]         # (1, 128)
    gamma = param_ref[R_BIAS + 4:R_BIAS + 5, 0:H]      # (1, H)
    beta = param_ref[R_BIAS + 5:R_BIAS + 6, 0:H]       # (1, H)
    state = param_ref[R_STATE:R_STATE + BP, :]         # (BP, 128)
    h = state[:, 0:H]                                  # encoder h0 (padded rows = 0)
    c = state[:, H:2 * H]                              # encoder c0
    hd = state[:, 2 * H:3 * H]                         # decoder h0

    # ---- unpack the data slab ----
    x_rows = data_ref[0:tp * BP, 0:E]                  # (TP*BP, E)  time-major tokens
    cei = data_ref[tp * BP:(tp + steps) * BP, :]       # (S*BP, 2E)  [choice | index]
    plen = data_ref[(tp + steps) * BP:(tp + steps + 1) * BP, 0:1]   # (BP, 1) f32 lengths

    # static real-row mask (padded batch rows contribute nothing)
    rmask = (lax.broadcasted_iota(jnp.int32, (BP, 1), 0) < B).astype(f32)

    # ---------------- ProgramEncoder: masked LSTM (pack_padded_sequence equiv) ------
    xproj = jnp.dot(x_rows, lwih, preferred_element_type=f32) + lstm_b   # (TP*BP, 4H)
    for t in range(tp):                                # static unrolled recurrence
        gates = xproj[t * BP:(t + 1) * BP, :] + jnp.dot(
            h, lwhh, preferred_element_type=f32)       # (BP, 4H)
        i_g = jax.nn.sigmoid(gates[:, 0 * H:1 * H])
        f_g = jax.nn.sigmoid(gates[:, 1 * H:2 * H])
        g_g = jnp.tanh(gates[:, 2 * H:3 * H])
        o_g = jax.nn.sigmoid(gates[:, 3 * H:4 * H])
        c_new = f_g * c + i_g * g_g
        h_new = o_g * jnp.tanh(c_new)
        upd = plen > jnp.float32(t)                    # (BP, 1); False for padded rows
        h = jnp.where(upd, h_new, h)
        c = jnp.where(upd, c_new, c)
    program_emb = h                                    # (BP, H); padded rows stay 0

    # ---------------- NeuralParser decode loop --------------------------------------
    # Hoisted, lane-dense GRU input projections (3H padded to 128 lanes, pads = 0).
    gi_steps = jnp.dot(cei, gwci, preferred_element_type=f32)                # (S*BP, 128)
    gi_prog = jnp.dot(program_emb, gwp, preferred_element_type=f32) + gbih   # (BP, 128)
    hs = []
    for t in range(steps):                             # static unrolled decode loop
        # BatchNorm1d, train-mode batch statistics over the REAL rows only.
        mean = jnp.sum(hd, axis=0, keepdims=True) * (1.0 / B)    # padded rows of hd are 0
        cen = hd - mean
        var = jnp.sum(cen * cen * rmask, axis=0, keepdims=True) * (1.0 / B)
        hn = cen * lax.rsqrt(var + EPS) * gamma + beta
        # TODO(synk): nn.Dropout(p=0.2) in train mode is stochastic; identity here.
        gi = gi_steps[t * BP:(t + 1) * BP, :] + gi_prog                      # (BP, 128)
        gh = jnp.dot(hn, gwhh, preferred_element_type=f32) + gbhh            # (BP, 128)
        r = jax.nn.sigmoid(gi[:, 0 * H:1 * H] + gh[:, 0 * H:1 * H])
        z = jax.nn.sigmoid(gi[:, 1 * H:2 * H] + gh[:, 1 * H:2 * H])
        n = jnp.tanh(gi[:, 2 * H:3 * H] + r * gh[:, 2 * H:3 * H])
        hd = ((1.0 - z) * n + z * hn) * rmask          # keep padded rows exactly 0
        hs.append(hd)

    # ---- ONE fused inference-head matmul for all steps + lane-dense output ---------
    hstack = jnp.concatenate(hs, axis=0)                                   # (S*BP, H)
    logits = jnp.dot(hstack, winf, preferred_element_type=f32) + binf      # (S*BP, 128)
    out_ref[0:steps * BP, :] = logits
    out_ref[steps * BP:steps * BP + BP, :] = jnp.zeros((BP, NPAD), f32)
    out_ref[steps * BP:steps * BP + BP, 0:H] = hd      # final decoder hidden


# ------------------------------- parameter setup ------------------------------------
def init_params(key):
    ks = jax.random.split(key, 16)
    s = 0.1
    return {
        # ProgramEncoder
        "vocab_emb": jax.random.normal(ks[0], (VOCAB, E), jnp.float32) * s,
        "lstm_wih_t": jax.random.normal(ks[1], (E, 4 * H), jnp.float32) * s,   # W_ih^T
        "lstm_whh_t": jax.random.normal(ks[2], (H, 4 * H), jnp.float32) * s,   # W_hh^T
        "lstm_b": jax.random.normal(ks[3], (1, 4 * H), jnp.float32) * s,       # b_ih+b_hh
        "enc_h0": jax.random.normal(ks[4], (B, H), jnp.float32) * s,           # xavier h0
        "enc_c0": jax.random.normal(ks[5], (B, H), jnp.float32) * s,           # xavier c0
        # NeuralParser
        "index_emb": jax.random.normal(ks[6], (N_CHOICE, E), jnp.float32) * s,
        "choice_emb": jax.random.normal(ks[7], (N_CHOICE, C, E), jnp.float32) * s,
        "gru_wih_t": jax.random.normal(ks[8], (H + 2 * E, 3 * H), jnp.float32) * s,
        "gru_whh_t": jax.random.normal(ks[9], (H, 3 * H), jnp.float32) * s,
        "gru_bih": jax.random.normal(ks[10], (1, 3 * H), jnp.float32) * s,
        "gru_bhh": jax.random.normal(ks[11], (1, 3 * H), jnp.float32) * s,
        "bn_gamma": jnp.ones((1, H), jnp.float32),
        "bn_beta": jnp.zeros((1, H), jnp.float32),
        "inf_w": jax.random.normal(ks[12], (N_CHOICE, H, C), jnp.float32) * s,  # W^T stacked
        "inf_b": jax.random.normal(ks[13], (N_CHOICE, 1, C), jnp.float32) * s,
        "h0": jax.random.normal(ks[14], (B, H), jnp.float32) * s,               # init_hidden
    }


def _pad_lanes(x, width=NPAD):
    x = jnp.asarray(x, jnp.float32)
    r, c = x.shape
    if c == width:
        return x
    return jnp.concatenate([x, jnp.zeros((r, width - c), jnp.float32)], axis=1)


def prepare_kernel_params(p):
    """Pack every weight / bias / initial-state into ONE (PARAM_ROWS, 128) VMEM slab."""
    # GRU W_ih^T split by input block: input_emb = [choice (E) | program (H) | index (E)]
    wih_c = p["gru_wih_t"][:E]
    wih_p = p["gru_wih_t"][E:E + H]
    wih_i = p["gru_wih_t"][E + H:]
    gw_ci = jnp.concatenate([wih_c, wih_i], axis=0)          # rows match [ce | ie] lanes

    # fuse the N inference heads: head n -> output lanes [n*C, (n+1)*C)
    w2d = jnp.transpose(p["inf_w"], (1, 0, 2)).reshape(H, N_CHOICE * C)
    b2d = p["inf_b"].reshape(1, N_CHOICE * C)

    bias_block = jnp.zeros((BP, NPAD), jnp.float32)
    bias_block = bias_block.at[0:1].set(p["lstm_b"])
    bias_block = bias_block.at[1:2].set(_pad_lanes(p["gru_bih"]))
    bias_block = bias_block.at[2:3].set(_pad_lanes(p["gru_bhh"]))
    bias_block = bias_block.at[3:4].set(_pad_lanes(b2d))
    bias_block = bias_block.at[4:5].set(_pad_lanes(p["bn_gamma"]))
    bias_block = bias_block.at[5:6].set(_pad_lanes(p["bn_beta"]))

    state_block = jnp.zeros((BP, NPAD), jnp.float32)
    state_block = state_block.at[:B, 0:H].set(p["enc_h0"])
    state_block = state_block.at[:B, H:2 * H].set(p["enc_c0"])
    state_block = state_block.at[:B, 2 * H:3 * H].set(p["h0"])

    param_slab = jnp.concatenate([
        p["lstm_wih_t"],               # R_LWIH
        p["lstm_whh_t"],               # R_LWHH
        _pad_lanes(gw_ci),             # R_GWCI
        _pad_lanes(wih_p),             # R_GWP
        _pad_lanes(p["gru_whh_t"]),    # R_GWHH
        _pad_lanes(w2d),               # R_WINF
        bias_block,                    # R_BIAS
        state_block,                   # R_STATE
    ], axis=0)
    assert param_slab.shape == (PARAM_ROWS, NPAD)

    return {"param_slab": param_slab,
            "vocab_emb": p["vocab_emb"],
            "index_emb": p["index_emb"],
            "choice_emb": p["choice_emb"]}


# ------------------------------- forward (jitted glue) ------------------------------
@jax.jit
def neural_parser_forward_device(kp, program, program_len, trace, choices):
    batch_size, max_trace_len = trace.shape
    steps = max_trace_len - 1
    tp = program.shape[1]
    assert batch_size == B and batch_size <= BP

    # ---- gathers (XLA side): program-token / choice / index embeddings ----
    x_emb = kp["vocab_emb"][program]                                   # (B, TP, E)
    prev = trace[:, :-1]                                               # (B, S)
    index_emb = kp["index_emb"][prev]                                  # (B, S, E)
    choice_value = jnp.take_along_axis(choices, prev, axis=1)          # (B, S)
    choice_emb = kp["choice_emb"][prev, choice_value]                  # (B, S, E)

    # ---- pack the per-call data slab: time-major rows, batch padded to BP ----
    def rows(x):                                                       # (B, T, E) -> (T*BP, E)
        t = x.shape[1]
        xp = jnp.zeros((t, BP, E), jnp.float32)
        xp = xp.at[:, :batch_size].set(jnp.transpose(x, (1, 0, 2)))
        return xp.reshape(t * BP, E)

    x_block = jnp.concatenate(
        [rows(x_emb), jnp.zeros((tp * BP, E), jnp.float32)], axis=1)    # (TP*BP, 2E)
    cei_block = jnp.concatenate([rows(choice_emb), rows(index_emb)], axis=1)  # (S*BP, 2E)
    plen = jnp.zeros((BP,), jnp.float32).at[:batch_size].set(
        program_len.astype(jnp.float32))
    plen_block = jnp.broadcast_to(plen[:, None], (BP, DATA_W))                # (BP, 2E)
    data_slab = jnp.concatenate([x_block, cei_block, plen_block], axis=0)     # (DATA_ROWS, 2E)

    out = pl.pallas_call(
        fused_parser_kernel,
        out_shape=jax.ShapeDtypeStruct((steps * BP + BP, NPAD), jnp.float32),
        in_specs=[_VMEM, _VMEM],
        out_specs=_VMEM,
    )(kp["param_slab"], data_slab)

    # slice off padding: (steps, B, n_heads, n_classes) logits + final hidden
    logits = out[:steps * BP].reshape(steps, BP, NPAD)[:, :batch_size, :N_CHOICE * C]
    preds_full = logits.reshape(steps, batch_size, N_CHOICE, C)
    hout = out[steps * BP:steps * BP + batch_size, :H]
    return preds_full, hout


def neural_parser_forward(kp, program, program_len, trace, trace_len, choices):
    """Returns preds (ragged list-of-lists of (C,) logits) and the final hidden state."""
    preds_full, h = neural_parser_forward_device(kp, program, program_len, trace, choices)
    # Single host sync at the end: ragged 'not_ended' filtering + head selection.
    trace_np = np.asarray(trace)
    batch_size, max_trace_len = trace_np.shape
    preds = [[] for _ in range(batch_size)]
    for t in range(max_trace_len - 1):
        for b in range(batch_size):
            cur = int(trace_np[b, t + 1])
            if cur != 0:                               # not_ended
                preds[b].append(preds_full[t, b, cur])  # (C,) logits of head `cur`
    return preds, h


# ---------------------------------- main ---------------------------------------------
if __name__ == "__main__":
    key = jax.random.PRNGKey(0)
    pkey, dkey = jax.random.split(key)
    params = prepare_kernel_params(init_params(pkey))

    d1, d2, d3 = jax.random.split(dkey, 3)
    program = jax.random.randint(d1, (B, TP), 1, VOCAB, dtype=jnp.int32)
    program_len = jnp.array([TP, TP - 3], dtype=jnp.int32)
    trace = jax.random.randint(d2, (B, TT), 0, N_CHOICE, dtype=jnp.int32)
    trace = trace.at[:, 0].set(1)                      # valid first prev_choice
    trace_len = jnp.array([TT, TT - 1], dtype=jnp.int32)
    choices = jax.random.randint(d3, (B, N_CHOICE), 0, C, dtype=jnp.int32)

    preds, h_final = neural_parser_forward(params, program, program_len,
                                           trace, trace_len, choices)

    jax.block_until_ready(h_final)
    for pred_list in preds:
        for pvec in pred_list:
            jax.block_until_ready(pvec)
            assert pvec.shape == (C,)
    print("KERNEL_OK")
</pallas_src>

<mosaic_0001>
module attributes {stable_mosaic.version = 11 : i64} {
  func.func @fused_parser_kernel(%arg0: memref<240x128xf32, #tpu.memory_space<vmem>>, %arg1: memref<112x64xf32, #tpu.memory_space<vmem>>, %arg2: memref<48x128xf32, #tpu.memory_space<vmem>>) attributes {dimension_semantics = [], scalar_prefetch = 0 : i64, scratch_operands = 0 : i64, tpu.core_type = #tpu.core_type<tc>} {
    %c0 = arith.constant 0 : index
    %c0_0 = arith.constant 0 : index
    %0 = vector.load %arg0[%c0, %c0_0] : memref<240x128xf32, #tpu.memory_space<vmem>>, vector<32x128xf32>
    %c32 = arith.constant 32 : index
    %c0_1 = arith.constant 0 : index
    %1 = vector.load %arg0[%c32, %c0_1] : memref<240x128xf32, #tpu.memory_space<vmem>>, vector<32x128xf32>
    %c64 = arith.constant 64 : index
    %c0_2 = arith.constant 0 : index
    %2 = vector.load %arg0[%c64, %c0_2] : memref<240x128xf32, #tpu.memory_space<vmem>>, vector<64x128xf32>
    %c128 = arith.constant 128 : index
    %c0_3 = arith.constant 0 : index
    %3 = vector.load %arg0[%c128, %c0_3] : memref<240x128xf32, #tpu.memory_space<vmem>>, vector<32x128xf32>
    %c160 = arith.constant 160 : index
    %c0_4 = arith.constant 0 : index
    %4 = vector.load %arg0[%c160, %c0_4] : memref<240x128xf32, #tpu.memory_space<vmem>>, vector<32x128xf32>
    %c192 = arith.constant 192 : index
    %c0_5 = arith.constant 0 : index
    %5 = vector.load %arg0[%c192, %c0_5] : memref<240x128xf32, #tpu.memory_space<vmem>>, vector<32x128xf32>
    %c224 = arith.constant 224 : index
    %c0_6 = arith.constant 0 : index
    %6 = vector.load %arg0[%c224, %c0_6] : memref<240x128xf32, #tpu.memory_space<vmem>>, vector<1x128xf32>
    %c225 = arith.constant 225 : index
    %c0_7 = arith.constant 0 : index
    %7 = vector.load %arg0[%c225, %c0_7] : memref<240x128xf32, #tpu.memory_space<vmem>>, vector<1x128xf32>
    %c226 = arith.constant 226 : index
    %c0_8 = arith.constant 0 : index
    %8 = vector.load %arg0[%c226, %c0_8] : memref<240x128xf32, #tpu.memory_space<vmem>>, vector<1x128xf32>
    %c227 = arith.constant 227 : index
    %c0_9 = arith.constant 0 : index
    %9 = vector.load %arg0[%c227, %c0_9] : memref<240x128xf32, #tpu.memory_space<vmem>>, vector<1x128xf32>
    %c228 = arith.constant 228 : index
    %c0_10 = arith.constant 0 : index
    %10 = vector.load %arg0[%c228, %c0_10] : memref<240x128xf32, #tpu.memory_space<vmem>>, vector<1x32xf32>
    %c229 = arith.constant 229 : index
    %c0_11 = arith.constant 0 : index
    %11 = vector.load %arg0[%c229, %c0_11] : memref<240x128xf32, #tpu.memory_space<vmem>>, vector<1x32xf32>
    %c232 = arith.constant 232 : index
    %c0_12 = arith.constant 0 : index
    %12 = vector.load %arg0[%c232, %c0_12] : memref<240x128xf32, #tpu.memory_space<vmem>>, vector<8x128xf32>
    %13 = vector.extract_strided_slice %12 {offsets = [0, 0], sizes = [8, 32], strides = [1, 1]} : vector<8x128xf32> to vector<8x32xf32>
    %14 = vector.extract_strided_slice %12 {offsets = [0, 32], sizes = [8, 32], strides = [1, 1]} : vector<8x128xf32> to vector<8x32xf32>
    %15 = vector.extract_strided_slice %12 {offsets = [0, 64], sizes = [8, 32], strides = [1, 1]} : vector<8x128xf32> to vector<8x32xf32>
    %c0_13 = arith.constant 0 : index
    %c0_14 = arith.constant 0 : index
    %16 = vector.load %arg1[%c0_13, %c0_14] : memref<112x64xf32, #tpu.memory_space<vmem>>, vector<64x32xf32>
    %c64_15 = arith.constant 64 : index
    %c0_16 = arith.constant 0 : index
    %17 = vector.load %arg1[%c64_15, %c0_16] : memref<112x64xf32, #tpu.memory_space<vmem>>, vector<40x64xf32>
    %c104 = arith.constant 104 : index
    %c0_17 = arith.constant 0 : index
    %18 = vector.load %arg1[%c104, %c0_17] : memref<112x64xf32, #tpu.memory_space<vmem>>, vector<8x1xf32>
    %19 = tpu.iota {dimensions = array<i32: 0>} : vector<8x1xi32>
    %c2_i32 = arith.constant 2 : i32
    %20 = vector.broadcast %c2_i32 : i32 to vector<8x1xi32>
    %21 = arith.cmpi slt, %19, %20 : vector<8x1xi32>
    %22 = arith.extui %21 : vector<8x1xi1> to vector<8x1xi32>
    %23 = arith.sitofp %22 : vector<8x1xi32> to vector<8x1xf32>
    %cst = arith.constant dense<0.000000e+00> : vector<64x128xf32>
    %24 = tpu.matmul %16, %0, %cst {dimension_numbers = #tpu.dot_dimension_numbers<[1], [0], [0], [1], [0, 0, 1, 1], [], []>} : vector<64x32xf32>, vector<32x128xf32>, vector<64x128xf32> -> vector<64x128xf32>
    %25 = vector.broadcast %6 : vector<1x128xf32> to vector<64x128xf32>
    %26 = arith.addf %24, %25 : vector<64x128xf32>
    %27 = vector.extract_strided_slice %26 {offsets = [0, 0], sizes = [8, 128], strides = [1, 1]} : vector<64x128xf32> to vector<8x128xf32>
    %cst_18 = arith.constant dense<0.000000e+00> : vector<8x128xf32>
    %28 = tpu.matmul %13, %1, %cst_18 {dimension_numbers = #tpu.dot_dimension_numbers<[1], [0], [0], [1], [0, 0, 1, 1], [], []>} : vector<8x32xf32>, vector<32x128xf32>, vector<8x128xf32> -> vector<8x128xf32>
    %29 = arith.addf %27, %28 : vector<8x128xf32>
    %30 = vector.extract_strided_slice %29 {offsets = [0, 0], sizes = [8, 32], strides = [1, 1]} : vector<8x128xf32> to vector<8x32xf32>
    %31 = arith.negf %30 : vector<8x32xf32>
    %32 = math.exp %31 : vector<8x32xf32>
    %cst_19 = arith.constant 1.000000e+00 : f32
    %33 = vector.broadcast %cst_19 : f32 to vector<8x32xf32>
    %34 = arith.addf %33, %32 : vector<8x32xf32>
    %35 = arith.divf %33, %34 : vector<8x32xf32>
    %36 = vector.extract_strided_slice %29 {offsets = [0, 32], sizes = [8, 32], strides = [1, 1]} : vector<8x128xf32> to vector<8x32xf32>
    %37 = arith.negf %36 : vector<8x32xf32>
    %38 = math.exp %37 : vector<8x32xf32>
    %cst_20 = arith.constant 1.000000e+00 : f32
    %39 = vector.broadcast %cst_20 : f32 to vector<8x32xf32>
    %40 = arith.addf %39, %38 : vector<8x32xf32>
    %41 = arith.divf %39, %40 : vector<8x32xf32>
    %42 = vector.extract_strided_slice %29 {offsets = [0, 64], sizes = [8, 32], strides = [1, 1]} : vector<8x128xf32> to vector<8x32xf32>
    %43 = math.tanh %42 : vector<8x32xf32>
    %44 = vector.extract_strided_slice %29 {offsets = [0, 96], sizes = [8, 32], strides = [1, 1]} : vector<8x128xf32> to vector<8x32xf32>
    %45 = arith.negf %44 : vector<8x32xf32>
    %46 = math.exp %45 : vector<8x32xf32>
    %cst_21 = arith.constant 1.000000e+00 : f32
    %47 = vector.broadcast %cst_21 : f32 to vector<8x32xf32>
    %48 = arith.addf %47, %46 : vector<8x32xf32>
    %49 = arith.divf %47, %48 : vector<8x32xf32>
    %50 = arith.mulf %41, %14 : vector<8x32xf32>
    %51 = arith.mulf %35, %43 : vector<8x32xf32>
    %52 = arith.addf %50, %51 : vector<8x32xf32>
    %53 = math.tanh %52 : vector<8x32xf32>
    %54 = arith.mulf %49, %53 : vector<8x32xf32>
    %cst_22 = arith.constant 0.000000e+00 : f32
    %55 = vector.broadcast %cst_22 : f32 to vector<8x1xf32>
    %56 = arith.cmpf ogt, %18, %55 : vector<8x1xf32>
    %57 = vector.shape_cast %56 : vector<8x1xi1> to vector<8x1xi1>
    %58 = vector.broadcast %57 : vector<8x1xi1> to vector<8x32xi1>
    %59 = arith.select %58, %54, %13 : vector<8x32xi1>, vector<8x32xf32>
    %60 = vector.shape_cast %56 : vector<8x1xi1> to vector<8x1xi1>
    %61 = vector.broadcast %60 : vector<8x1xi1> to vector<8x32xi1>
    %62 = arith.select %61, %52, %14 : vector<8x32xi1>, vector<8x32xf32>
    %63 = vector.extract_strided_slice %26 {offsets = [8, 0], sizes = [8, 128], strides = [1, 1]} : vector<64x128xf32> to vector<8x128xf32>
    %cst_23 = arith.constant dense<0.000000e+00> : vector<8x128xf32>
    %64 = tpu.matmul %59, %1, %cst_23 {dimension_numbers = #tpu.dot_dimension_numbers<[1], [0], [0], [1], [0, 0, 1, 1], [], []>} : vector<8x32xf32>, vector<32x128xf32>, vector<8x128xf32> -> vector<8x128xf32>
    %65 = arith.addf %63, %64 : vector<8x128xf32>
    %66 = vector.extract_strided_slice %65 {offsets = [0, 0], sizes = [8, 32], strides = [1, 1]} : vector<8x128xf32> to vector<8x32xf32>
    %67 = arith.negf %66 : vector<8x32xf32>
    %68 = math.exp %67 : vector<8x32xf32>
    %cst_24 = arith.constant 1.000000e+00 : f32
    %69 = vector.broadcast %cst_24 : f32 to vector<8x32xf32>
    %70 = arith.addf %69, %68 : vector<8x32xf32>
    %71 = arith.divf %69, %70 : vector<8x32xf32>
    %72 = vector.extract_strided_slice %65 {offsets = [0, 32], sizes = [8, 32], strides = [1, 1]} : vector<8x128xf32> to vector<8x32xf32>
    %73 = arith.negf %72 : vector<8x32xf32>
    %74 = math.exp %73 : vector<8x32xf32>
    %cst_25 = arith.constant 1.000000e+00 : f32
    %75 = vector.broadcast %cst_25 : f32 to vector<8x32xf32>
    %76 = arith.addf %75, %74 : vector<8x32xf32>
    %77 = arith.divf %75, %76 : vector<8x32xf32>
    %78 = vector.extract_strided_slice %65 {offsets = [0, 64], sizes = [8, 32], strides = [1, 1]} : vector<8x128xf32> to vector<8x32xf32>
    %79 = math.tanh %78 : vector<8x32xf32>
    %80 = vector.extract_strided_slice %65 {offsets = [0, 96], sizes = [8, 32], strides = [1, 1]} : vector<8x128xf32> to vector<8x32xf32>
    %81 = arith.negf %80 : vector<8x32xf32>
    %82 = math.exp %81 : vector<8x32xf32>
    %cst_26 = arith.constant 1.000000e+00 : f32
    %83 = vector.broadcast %cst_26 : f32 to vector<8x32xf32>
    %84 = arith.addf %83, %82 : vector<8x32xf32>
    %85 = arith.divf %83, %84 : vector<8x32xf32>
    %86 = arith.mulf %77, %62 : vector<8x32xf32>
    %87 = arith.mulf %71, %79 : vector<8x32xf32>
    %88 = arith.addf %86, %87 : vector<8x32xf32>
    %89 = math.tanh %88 : vector<8x32xf32>
    %90 = arith.mulf %85, %89 : vector<8x32xf32>
    %cst_27 = arith.constant 1.000000e+00 : f32
    %91 = vector.broadcast %cst_27 : f32 to vector<8x1xf32>
    %92 = arith.cmpf ogt, %18, %91 : vector<8x1xf32>
    %93 = vector.shape_cast %92 : vector<8x1xi1> to vector<8x1xi1>
    %94 = vector.broadcast %93 : vector<8x1xi1> to vector<8x32xi1>
    %95 = arith.select %94, %90, %59 : vector<8x32xi1>, vector<8x32xf32>
    %96 = vector.shape_cast %92 : vector<8x1xi1> to vector<8x1xi1>
    %97 = vector.broadcast %96 : vector<8x1xi1> to vector<8x32xi1>
    %98 = arith.select %97, %88, %62 : vector<8x32xi1>, vector<8x32xf32>
    %99 = vector.extract_strided_slice %26 {offsets = [16, 0], sizes = [8, 128], strides = [1, 1]} : vector<64x128xf32> to vector<8x128xf32>
    %cst_28 = arith.constant dense<0.000000e+00> : vector<8x128xf32>
    %100 = tpu.matmul %95, %1, %cst_28 {dimension_numbers = #tpu.dot_dimension_numbers<[1], [0], [0], [1], [0, 0, 1, 1], [], []>} : vector<8x32xf32>, vector<32x128xf32>, vector<8x128xf32> -> vector<8x128xf32>
    %101 = arith.addf %99, %100 : vector<8x128xf32>
    %102 = vector.extract_strided_slice %101 {offsets = [0, 0], sizes = [8, 32], strides = [1, 1]} : vector<8x128xf32> to vector<8x32xf32>
    %103 = arith.negf %102 : vector<8x32xf32>
    %104 = math.exp %103 : vector<8x32xf32>
    %cst_29 = arith.constant 1.000000e+00 : f32
    %105 = vector.broadcast %cst_29 : f32 to vector<8x32xf32>
    %106 = arith.addf %105, %104 : vector<8x32xf32>
    %107 = arith.divf %105, %106 : vector<8x32xf32>
    %108 = vector.extract_strided_slice %101 {offsets = [0, 32], sizes = [8, 32], strides = [1, 1]} : vector<8x128xf32> to vector<8x32xf32>
    %109 = arith.negf %108 : vector<8x32xf32>
    %110 = math.exp %109 : vector<8x32xf32>
    %cst_30 = arith.constant 1.000000e+00 : f32
    %111 = vector.broadcast %cst_30 : f32 to vector<8x32xf32>
    %112 = arith.addf %111, %110 : vector<8x32xf32>
    %113 = arith.divf %111, %112 : vector<8x32xf32>
    %114 = vector.extract_strided_slice %101 {offsets = [0, 64], sizes = [8, 32], strides = [1, 1]} : vector<8x128xf32> to vector<8x32xf32>
    %115 = math.tanh %114 : vector<8x32xf32>
    %116 = vector.extract_strided_slice %101 {offsets = [0, 96], sizes = [8, 32], strides = [1, 1]} : vector<8x128xf32> to vector<8x32xf32>
    %117 = arith.negf %116 : vector<8x32xf32>
    %118 = math.exp %117 : vector<8x32xf32>
    %cst_31 = arith.constant 1.000000e+00 : f32
    %119 = vector.broadcast %cst_31 : f32 to vector<8x32xf32>
    %120 = arith.addf %119, %118 : vector<8x32xf32>
    %121 = arith.divf %119, %120 : vector<8x32xf32>
    %122 = arith.mulf %113, %98 : vector<8x32xf32>
    %123 = arith.mulf %107, %115 : vector<8x32xf32>
    %124 = arith.addf %122, %123 : vector<8x32xf32>
    %125 = math.tanh %124 : vector<8x32xf32>
    %126 = arith.mulf %121, %125 : vector<8x32xf32>
    %cst_32 = arith.constant 2.000000e+00 : f32
    %127 = vector.broadcast %cst_32 : f32 to vector<8x1xf32>
    %128 = arith.cmpf ogt, %18, %127 : vector<8x1xf32>
    %129 = vector.shape_cast %128 : vector<8x1xi1> to vector<8x1xi1>
    %130 = vector.broadcast %129 : vector<8x1xi1> to vector<8x32xi1>
    %131 = arith.select %130, %126, %95 : vector<8x32xi1>, vector<8x32xf32>
    %132 = vector.shape_cast %128 : vector<8x1xi1> to vector<8x1xi1>
    %133 = vector.broadcast %132 : vector<8x1xi1> to vector<8x32xi1>
    %134 = arith.select %133, %124, %98 : vector<8x32xi1>, vector<8x32xf32>
    %135 = vector.extract_strided_slice %26 {offsets = [24, 0], sizes = [8, 128], strides = [1, 1]} : vector<64x128xf32> to vector<8x128xf32>
    %cst_33 = arith.constant dense<0.000000e+00> : vector<8x128xf32>
    %136 = tpu.matmul %131, %1, %cst_33 {dimension_numbers = #tpu.dot_dimension_numbers<[1], [0], [0], [1], [0, 0, 1, 1], [], []>} : vector<8x32xf32>, vector<32x128xf32>, vector<8x128xf32> -> vector<8x128xf32>
    %137 = arith.addf %135, %136 : vector<8x128xf32>
    %138 = vector.extract_strided_slice %137 {offsets = [0, 0], sizes = [8, 32], strides = [1, 1]} : vector<8x128xf32> to vector<8x32xf32>
    %139 = arith.negf %138 : vector<8x32xf32>
    %140 = math.exp %139 : vector<8x32xf32>
    %cst_34 = arith.constant 1.000000e+00 : f32
    %141 = vector.broadcast %cst_34 : f32 to vector<8x32xf32>
    %142 = arith.addf %141, %140 : vector<8x32xf32>
    %143 = arith.divf %141, %142 : vector<8x32xf32>
    %144 = vector.extract_strided_slice %137 {offsets = [0, 32], sizes = [8, 32], strides = [1, 1]} : vector<8x128xf32> to vector<8x32xf32>
    %145 = arith.negf %144 : vector<8x32xf32>
    %146 = math.exp %145 : vector<8x32xf32>
    %cst_35 = arith.constant 1.000000e+00 : f32
    %147 = vector.broadcast %cst_35 : f32 to vector<8x32xf32>
    %148 = arith.addf %147, %146 : vector<8x32xf32>
    %149 = arith.divf %147, %148 : vector<8x32xf32>
    %150 = vector.extract_strided_slice %137 {offsets = [0, 64], sizes = [8, 32], strides = [1, 1]} : vector<8x128xf32> to vector<8x32xf32>
    %151 = math.tanh %150 : vector<8x32xf32>
    %152 = vector.extract_strided_slice %137 {offsets = [0, 96], sizes = [8, 32], strides = [1, 1]} : vector<8x128xf32> to vector<8x32xf32>
    %153 = arith.negf %152 : vector<8x32xf32>
    %154 = math.exp %153 : vector<8x32xf32>
    %cst_36 = arith.constant 1.000000e+00 : f32
    %155 = vector.broadcast %cst_36 : f32 to vector<8x32xf32>
    %156 = arith.addf %155, %154 : vector<8x32xf32>
    %157 = arith.divf %155, %156 : vector<8x32xf32>
    %158 = arith.mulf %149, %134 : vector<8x32xf32>
    %159 = arith.mulf %143, %151 : vector<8x32xf32>
    %160 = arith.addf %158, %159 : vector<8x32xf32>
    %161 = math.tanh %160 : vector<8x32xf32>
    %162 = arith.mulf %157, %161 : vector<8x32xf32>
    %cst_37 = arith.constant 3.000000e+00 : f32
    %163 = vector.broadcast %cst_37 : f32 to vector<8x1xf32>
    %164 = arith.cmpf ogt, %18, %163 : vector<8x1xf32>
    %165 = vector.shape_cast %164 : vector<8x1xi1> to vector<8x1xi1>
    %166 = vector.broadcast %165 : vector<8x1xi1> to vector<8x32xi1>
    %167 = arith.select %166, %162, %131 : vector<8x32xi1>, vector<8x32xf32>
    %168 = vector.shape_cast %164 : vector<8x1xi1> to vector<8x1xi1>
    %169 = vector.broadcast %168 : vector<8x1xi1> to vector<8x32xi1>
    %170 = arith.select %169, %160, %134 : vector<8x32xi1>, vector<8x32xf32>
    %171 = vector.extract_strided_slice %26 {offsets = [32, 0], sizes = [8, 128], strides = [1, 1]} : vector<64x128xf32> to vector<8x128xf32>
    %cst_38 = arith.constant dense<0.000000e+00> : vector<8x128xf32>
    %172 = tpu.matmul %167, %1, %cst_38 {dimension_numbers = #tpu.dot_dimension_numbers<[1], [0], [0], [1], [0, 0, 1, 1], [], []>} : vector<8x32xf32>, vector<32x128xf32>, vector<8x128xf32> -> vector<8x128xf32>
    %173 = arith.addf %171, %172 : vector<8x128xf32>
    %174 = vector.extract_strided_slice %173 {offsets = [0, 0], sizes = [8, 32], strides = [1, 1]} : vector<8x128xf32> to vector<8x32xf32>
    %175 = arith.negf %174 : vector<8x32xf32>
    %176 = math.exp %175 : vector<8x32xf32>
    %cst_39 = arith.constant 1.000000e+00 : f32
    %177 = vector.broadcast %cst_39 : f32 to vector<8x32xf32>
    %178 = arith.addf %177, %176 : vector<8x32xf32>
    %179 = arith.divf %177, %178 : vector<8x32xf32>
    %180 = vector.extract_strided_slice %173 {offsets = [0, 32], sizes = [8, 32], strides = [1, 1]} : vector<8x128xf32> to vector<8x32xf32>
    %181 = arith.negf %180 : vector<8x32xf32>
    %182 = math.exp %181 : vector<8x32xf32>
    %cst_40 = arith.constant 1.000000e+00 : f32
    %183 = vector.broadcast %cst_40 : f32 to vector<8x32xf32>
    %184 = arith.addf %183, %182 : vector<8x32xf32>
    %185 = arith.divf %183, %184 : vector<8x32xf32>
    %186 = vector.extract_strided_slice %173 {offsets = [0, 64], sizes = [8, 32], strides = [1, 1]} : vector<8x128xf32> to vector<8x32xf32>
    %187 = math.tanh %186 : vector<8x32xf32>
    %188 = vector.extract_strided_slice %173 {offsets = [0, 96], sizes = [8, 32], strides = [1, 1]} : vector<8x128xf32> to vector<8x32xf32>
    %189 = arith.negf %188 : vector<8x32xf32>
    %190 = math.exp %189 : vector<8x32xf32>
    %cst_41 = arith.constant 1.000000e+00 : f32
    %191 = vector.broadcast %cst_41 : f32 to vector<8x32xf32>
    %192 = arith.addf %191, %190 : vector<8x32xf32>
    %193 = arith.divf %191, %192 : vector<8x32xf32>
    %194 = arith.mulf %185, %170 : vector<8x32xf32>
    %195 = arith.mulf %179, %187 : vector<8x32xf32>
    %196 = arith.addf %194, %195 : vector<8x32xf32>
    %197 = math.tanh %196 : vector<8x32xf32>
    %198 = arith.mulf %193, %197 : vector<8x32xf32>
    %cst_42 = arith.constant 4.000000e+00 : f32
    %199 = vector.broadcast %cst_42 : f32 to vector<8x1xf32>
    %200 = arith.cmpf ogt, %18, %199 : vector<8x1xf32>
    %201 = vector.shape_cast %200 : vector<8x1xi1> to vector<8x1xi1>
    %202 = vector.broadcast %201 : vector<8x1xi1> to vector<8x32xi1>
    %203 = arith.select %202, %198, %167 : vector<8x32xi1>, vector<8x32xf32>
    %204 = vector.shape_cast %200 : vector<8x1xi1> to vector<8x1xi1>
    %205 = vector.broadcast %204 : vector<8x1xi1> to vector<8x32xi1>
    %206 = arith.select %205, %196, %170 : vector<8x32xi1>, vector<8x32xf32>
    %207 = vector.extract_strided_slice %26 {offsets = [40, 0], sizes = [8, 128], strides = [1, 1]} : vector<64x128xf32> to vector<8x128xf32>
    %cst_43 = arith.constant dense<0.000000e+00> : vector<8x128xf32>
    %208 = tpu.matmul %203, %1, %cst_43 {dimension_numbers = #tpu.dot_dimension_numbers<[1], [0], [0], [1], [0, 0, 1, 1], [], []>} : vector<8x32xf32>, vector<32x128xf32>, vector<8x128xf32> -> vector<8x128xf32>
    %209 = arith.addf %207, %208 : vector<8x128xf32>
    %210 = vector.extract_strided_slice %209 {offsets = [0, 0], sizes = [8, 32], strides = [1, 1]} : vector<8x128xf32> to vector<8x32xf32>
    %211 = arith.negf %210 : vector<8x32xf32>
    %212 = math.exp %211 : vector<8x32xf32>
    %cst_44 = arith.constant 1.000000e+00 : f32
    %213 = vector.broadcast %cst_44 : f32 to vector<8x32xf32>
    %214 = arith.addf %213, %212 : vector<8x32xf32>
    %215 = arith.divf %213, %214 : vector<8x32xf32>
    %216 = vector.extract_strided_slice %209 {offsets = [0, 32], sizes = [8, 32], strides = [1, 1]} : vector<8x128xf32> to vector<8x32xf32>
    %217 = arith.negf %216 : vector<8x32xf32>
    %218 = math.exp %217 : vector<8x32xf32>
    %cst_45 = arith.constant 1.000000e+00 : f32
    %219 = vector.broadcast %cst_45 : f32 to vector<8x32xf32>
    %220 = arith.addf %219, %218 : vector<8x32xf32>
    %221 = arith.divf %219, %220 : vector<8x32xf32>
    %222 = vector.extract_strided_slice %209 {offsets = [0, 64], sizes = [8, 32], strides = [1, 1]} : vector<8x128xf32> to vector<8x32xf32>
    %223 = math.tanh %222 : vector<8x32xf32>
    %224 = vector.extract_strided_slice %209 {offsets = [0, 96], sizes = [8, 32], strides = [1, 1]} : vector<8x128xf32> to vector<8x32xf32>
    %225 = arith.negf %224 : vector<8x32xf32>
    %226 = math.exp %225 : vector<8x32xf32>
    %cst_46 = arith.constant 1.000000e+00 : f32
    %227 = vector.broadcast %cst_46 : f32 to vector<8x32xf32>
    %228 = arith.addf %227, %226 : vector<8x32xf32>
    %229 = arith.divf %227, %228 : vector<8x32xf32>
    %230 = arith.mulf %221, %206 : vector<8x32xf32>
    %231 = arith.mulf %215, %223 : vector<8x32xf32>
    %232 = arith.addf %230, %231 : vector<8x32xf32>
    %233 = math.tanh %232 : vector<8x32xf32>
    %234 = arith.mulf %229, %233 : vector<8x32xf32>
    %cst_47 = arith.constant 5.000000e+00 : f32
    %235 = vector.broadcast %cst_47 : f32 to vector<8x1xf32>
    %236 = arith.cmpf ogt, %18, %235 : vector<8x1xf32>
    %237 = vector.shape_cast %236 : vector<8x1xi1> to vector<8x1xi1>
    %238 = vector.broadcast %237 : vector<8x1xi1> to vector<8x32xi1>
    %239 = arith.select %238, %234, %203 : vector<8x32xi1>, vector<8x32xf32>
    %240 = vector.shape_cast %236 : vector<8x1xi1> to vector<8x1xi1>
    %241 = vector.broadcast %240 : vector<8x1xi1> to vector<8x32xi1>
    %242 = arith.select %241, %232, %206 : vector<8x32xi1>, vector<8x32xf32>
    %243 = vector.extract_strided_slice %26 {offsets = [48, 0], sizes = [8, 128], strides = [1, 1]} : vector<64x128xf32> to vector<8x128xf32>
    %cst_48 = arith.constant dense<0.000000e+00> : vector<8x128xf32>
    %244 = tpu.matmul %239, %1, %cst_48 {dimension_numbers = #tpu.dot_dimension_numbers<[1], [0], [0], [1], [0, 0, 1, 1], [], []>} : vector<8x32xf32>, vector<32x128xf32>, vector<8x128xf32> -> vector<8x128xf32>
    %245 = arith.addf %243, %244 : vector<8x128xf32>
    %246 = vector.extract_strided_slice %245 {offsets = [0, 0], sizes = [8, 32], strides = [1, 1]} : vector<8x128xf32> to vector<8x32xf32>
    %247 = arith.negf %246 : vector<8x32xf32>
    %248 = math.exp %247 : vector<8x32xf32>
    %cst_49 = arith.constant 1.000000e+00 : f32
    %249 = vector.broadcast %cst_49 : f32 to vector<8x32xf32>
    %250 = arith.addf %249, %248 : vector<8x32xf32>
    %251 = arith.divf %249, %250 : vector<8x32xf32>
    %252 = vector.extract_strided_slice %245 {offsets = [0, 32], sizes = [8, 32], strides = [1, 1]} : vector<8x128xf32> to vector<8x32xf32>
    %253 = arith.negf %252 : vector<8x32xf32>
    %254 = math.exp %253 : vector<8x32xf32>
    %cst_50 = arith.constant 1.000000e+00 : f32
    %255 = vector.broadcast %cst_50 : f32 to vector<8x32xf32>
    %256 = arith.addf %255, %254 : vector<8x32xf32>
    %257 = arith.divf %255, %256 : vector<8x32xf32>
    %258 = vector.extract_strided_slice %245 {offsets = [0, 64], sizes = [8, 32], strides = [1, 1]} : vector<8x128xf32> to vector<8x32xf32>
    %259 = math.tanh %258 : vector<8x32xf32>
    %260 = vector.extract_strided_slice %245 {offsets = [0, 96], sizes = [8, 32], strides = [1, 1]} : vector<8x128xf32> to vector<8x32xf32>
    %261 = arith.negf %260 : vector<8x32xf32>
    %262 = math.exp %261 : vector<8x32xf32>
    %cst_51 = arith.constant 1.000000e+00 : f32
    %263 = vector.broadcast %cst_51 : f32 to vector<8x32xf32>
    %264 = arith.addf %263, %262 : vector<8x32xf32>
    %265 = arith.divf %263, %264 : vector<8x32xf32>
    %266 = arith.mulf %257, %242 : vector<8x32xf32>
    %267 = arith.mulf %251, %259 : vector<8x32xf32>
    %268 = arith.addf %266, %267 : vector<8x32xf32>
    %269 = math.tanh %268 : vector<8x32xf32>
    %270 = arith.mulf %265, %269 : vector<8x32xf32>
    %cst_52 = arith.constant 6.000000e+00 : f32
    %271 = vector.broadcast %cst_52 : f32 to vector<8x1xf32>
    %272 = arith.cmpf ogt, %18, %271 : vector<8x1xf32>
    %273 = vector.shape_cast %272 : vector<8x1xi1> to vector<8x1xi1>
    %274 = vector.broadcast %273 : vector<8x1xi1> to vector<8x32xi1>
    %275 = arith.select %274, %270, %239 : vector<8x32xi1>, vector<8x32xf32>
    %276 = vector.shape_cast %272 : vector<8x1xi1> to vector<8x1xi1>
    %277 = vector.broadcast %276 : vector<8x1xi1> to vector<8x32xi1>
    %278 = arith.select %277, %268, %242 : vector<8x32xi1>, vector<8x32xf32>
    %279 = vector.extract_strided_slice %26 {offsets = [56, 0], sizes = [8, 128], strides = [1, 1]} : vector<64x128xf32> to vector<8x128xf32>
    %cst_53 = arith.constant dense<0.000000e+00> : vector<8x128xf32>
    %280 = tpu.matmul %275, %1, %cst_53 {dimension_numbers = #tpu.dot_dimension_numbers<[1], [0], [0], [1], [0, 0, 1, 1], [], []>} : vector<8x32xf32>, vector<32x128xf32>, vector<8x128xf32> -> vector<8x128xf32>
    %281 = arith.addf %279, %280 : vector<8x128xf32>
    %282 = vector.extract_strided_slice %281 {offsets = [0, 0], sizes = [8, 32], strides = [1, 1]} : vector<8x128xf32> to vector<8x32xf32>
    %283 = arith.negf %282 : vector<8x32xf32>
    %284 = math.exp %283 : vector<8x32xf32>
    %cst_54 = arith.constant 1.000000e+00 : f32
    %285 = vector.broadcast %cst_54 : f32 to vector<8x32xf32>
    %286 = arith.addf %285, %284 : vector<8x32xf32>
    %287 = arith.divf %285, %286 : vector<8x32xf32>
    %288 = vector.extract_strided_slice %281 {offsets = [0, 32], sizes = [8, 32], strides = [1, 1]} : vector<8x128xf32> to vector<8x32xf32>
    %289 = arith.negf %288 : vector<8x32xf32>
    %290 = math.exp %289 : vector<8x32xf32>
    %cst_55 = arith.constant 1.000000e+00 : f32
    %291 = vector.broadcast %cst_55 : f32 to vector<8x32xf32>
    %292 = arith.addf %291, %290 : vector<8x32xf32>
    %293 = arith.divf %291, %292 : vector<8x32xf32>
    %294 = vector.extract_strided_slice %281 {offsets = [0, 64], sizes = [8, 32], strides = [1, 1]} : vector<8x128xf32> to vector<8x32xf32>
    %295 = math.tanh %294 : vector<8x32xf32>
    %296 = vector.extract_strided_slice %281 {offsets = [0, 96], sizes = [8, 32], strides = [1, 1]} : vector<8x128xf32> to vector<8x32xf32>
    %297 = arith.negf %296 : vector<8x32xf32>
    %298 = math.exp %297 : vector<8x32xf32>
    %cst_56 = arith.constant 1.000000e+00 : f32
    %299 = vector.broadcast %cst_56 : f32 to vector<8x32xf32>
    %300 = arith.addf %299, %298 : vector<8x32xf32>
    %301 = arith.divf %299, %300 : vector<8x32xf32>
    %302 = arith.mulf %293, %278 : vector<8x32xf32>
    %303 = arith.mulf %287, %295 : vector<8x32xf32>
    %304 = arith.addf %302, %303 : vector<8x32xf32>
    %305 = math.tanh %304 : vector<8x32xf32>
    %306 = arith.mulf %301, %305 : vector<8x32xf32>
    %cst_57 = arith.constant 7.000000e+00 : f32
    %307 = vector.broadcast %cst_57 : f32 to vector<8x1xf32>
    %308 = arith.cmpf ogt, %18, %307 : vector<8x1xf32>
    %309 = vector.shape_cast %308 : vector<8x1xi1> to vector<8x1xi1>
    %310 = vector.broadcast %309 : vector<8x1xi1> to vector<8x32xi1>
    %311 = arith.select %310, %306, %275 : vector<8x32xi1>, vector<8x32xf32>
    %cst_58 = arith.constant dense<0.000000e+00> : vector<40x128xf32>
    %312 = tpu.matmul %17, %2, %cst_58 {dimension_numbers = #tpu.dot_dimension_numbers<[1], [0], [0], [1], [0, 0, 1, 1], [], []>} : vector<40x64xf32>, vector<64x128xf32>, vector<40x128xf32> -> vector<40x128xf32>
    %cst_59 = arith.constant dense<0.000000e+00> : vector<8x128xf32>
    %313 = tpu.matmul %311, %3, %cst_59 {dimension_numbers = #tpu.dot_dimension_numbers<[1], [0], [0], [1], [0, 0, 1, 1], [], []>} : vector<8x32xf32>, vector<32x128xf32>, vector<8x128xf32> -> vector<8x128xf32>
    %314 = vector.broadcast %7 : vector<1x128xf32> to vector<8x128xf32>
    %315 = arith.addf %313, %314 : vector<8x128xf32>
    %cst_60 = arith.constant dense<0.000000e+00> : vector<32xf32>
    %316 = vector.multi_reduction <add>, %15, %cst_60 [0] : vector<8x32xf32> to vector<32xf32>
    %317 = vector.shape_cast %316 : vector<32xf32> to vector<1x32xf32>
    %cst_61 = arith.constant 5.000000e-01 : f32
    %318 = vector.broadcast %cst_61 : f32 to vector<1x32xf32>
    %319 = arith.mulf %317, %318 : vector<1x32xf32>
    %320 = vector.broadcast %319 : vector<1x32xf32> to vector<8x32xf32>
    %321 = arith.subf %15, %320 : vector<8x32xf32>
    %322 = arith.mulf %321, %321 : vector<8x32xf32>
    %323 = vector.broadcast %23 : vector<8x1xf32> to vector<8x32xf32>
    %324 = arith.mulf %322, %323 : vector<8x32xf32>
    %cst_62 = arith.constant dense<0.000000e+00> : vector<32xf32>
    %325 = vector.multi_reduction <add>, %324, %cst_62 [0] : vector<8x32xf32> to vector<32xf32>
    %326 = vector.shape_cast %325 : vector<32xf32> to vector<1x32xf32>
    %cst_63 = arith.constant 5.000000e-01 : f32
    %327 = vector.broadcast %cst_63 : f32 to vector<1x32xf32>
    %328 = arith.mulf %326, %327 : vector<1x32xf32>
    %cst_64 = arith.constant 9.99999974E-6 : f32
    %329 = vector.broadcast %cst_64 : f32 to vector<1x32xf32>
    %330 = arith.addf %328, %329 : vector<1x32xf32>
    %331 = math.rsqrt %330 : vector<1x32xf32>
    %332 = vector.broadcast %331 : vector<1x32xf32> to vector<8x32xf32>
    %333 = arith.mulf %321, %332 : vector<8x32xf32>
    %334 = vector.broadcast %10 : vector<1x32xf32> to vector<8x32xf32>
    %335 = arith.mulf %333, %334 : vector<8x32xf32>
    %336 = vector.broadcast %11 : vector<1x32xf32> to vector<8x32xf32>
    %337 = arith.addf %335, %336 : vector<8x32xf32>
    %338 = vector.extract_strided_slice %312 {offsets = [0, 0], sizes = [8, 128], strides = [1, 1]} : vector<40x128xf32> to vector<8x128xf32>
    %339 = arith.addf %338, %315 : vector<8x128xf32>
    %cst_65 = arith.constant dense<0.000000e+00> : vector<8x128xf32>
    %340 = tpu.matmul %337, %4, %cst_65 {dimension_numbers = #tpu.dot_dimension_numbers<[1], [0], [0], [1], [0, 0, 1, 1], [], []>} : vector<8x32xf32>, vector<32x128xf32>, vector<8x128xf32> -> vector<8x128xf32>
    %341 = vector.broadcast %8 : vector<1x128xf32> to vector<8x128xf32>
    %342 = arith.addf %340, %341 : vector<8x128xf32>
    %343 = vector.extract_strided_slice %339 {offsets = [0, 0], sizes = [8, 32], strides = [1, 1]} : vector<8x128xf32> to vector<8x32xf32>
    %344 = vector.extract_strided_slice %342 {offsets = [0, 0], sizes = [8, 32], strides = [1, 1]} : vector<8x128xf32> to vector<8x32xf32>
    %345 = arith.addf %343, %344 : vector<8x32xf32>
    %346 = arith.negf %345 : vector<8x32xf32>
    %347 = math.exp %346 : vector<8x32xf32>
    %cst_66 = arith.constant 1.000000e+00 : f32
    %348 = vector.broadcast %cst_66 : f32 to vector<8x32xf32>
    %349 = arith.addf %348, %347 : vector<8x32xf32>
    %350 = arith.divf %348, %349 : vector<8x32xf32>
    %351 = vector.extract_strided_slice %339 {offsets = [0, 32], sizes = [8, 32], strides = [1, 1]} : vector<8x128xf32> to vector<8x32xf32>
    %352 = vector.extract_strided_slice %342 {offsets = [0, 32], sizes = [8, 32], strides = [1, 1]} : vector<8x128xf32> to vector<8x32xf32>
    %353 = arith.addf %351, %352 : vector<8x32xf32>
    %354 = arith.negf %353 : vector<8x32xf32>
    %355 = math.exp %354 : vector<8x32xf32>
    %cst_67 = arith.constant 1.000000e+00 : f32
    %356 = vector.broadcast %cst_67 : f32 to vector<8x32xf32>
    %357 = arith.addf %356, %355 : vector<8x32xf32>
    %358 = arith.divf %356, %357 : vector<8x32xf32>
    %359 = vector.extract_strided_slice %339 {offsets = [0, 64], sizes = [8, 32], strides = [1, 1]} : vector<8x128xf32> to vector<8x32xf32>
    %360 = vector.extract_strided_slice %342 {offsets = [0, 64], sizes = [8, 32], strides = [1, 1]} : vector<8x128xf32> to vector<8x32xf32>
    %361 = arith.mulf %350, %360 : vector<8x32xf32>
    %362 = arith.addf %359, %361 : vector<8x32xf32>
    %363 = math.tanh %362 : vector<8x32xf32>
    %cst_68 = arith.constant 1.000000e+00 : f32
    %364 = vector.broadcast %cst_68 : f32 to vector<8x32xf32>
    %365 = arith.subf %364, %358 : vector<8x32xf32>
    %366 = arith.mulf %365, %363 : vector<8x32xf32>
    %367 = arith.mulf %358, %337 : vector<8x32xf32>
    %368 = arith.addf %366, %367 : vector<8x32xf32>
    %369 = vector.broadcast %23 : vector<8x1xf32> to vector<8x32xf32>
    %370 = arith.mulf %368, %369 : vector<8x32xf32>
    %cst_69 = arith.constant dense<0.000000e+00> : vector<32xf32>
    %371 = vector.multi_reduction <add>, %370, %cst_69 [0] : vector<8x32xf32> to vector<32xf32>
    %372 = vector.shape_cast %371 : vector<32xf32> to vector<1x32xf32>
    %cst_70 = arith.constant 5.000000e-01 : f32
    %373 = vector.broadcast %cst_70 : f32 to vector<1x32xf32>
    %374 = arith.mulf %372, %373 : vector<1x32xf32>
    %375 = vector.broadcast %374 : vector<1x32xf32> to vector<8x32xf32>
    %376 = arith.subf %370, %375 : vector<8x32xf32>
    %377 = arith.mulf %376, %376 : vector<8x32xf32>
    %378 = vector.broadcast %23 : vector<8x1xf32> to vector<8x32xf32>
    %379 = arith.mulf %377, %378 : vector<8x32xf32>
    %cst_71 = arith.constant dense<0.000000e+00> : vector<32xf32>
    %380 = vector.multi_reduction <add>, %379, %cst_71 [0] : vector<8x32xf32> to vector<32xf32>
    %381 = vector.shape_cast %380 : vector<32xf32> to vector<1x32xf32>
    %cst_72 = arith.constant 5.000000e-01 : f32
    %382 = vector.broadcast %cst_72 : f32 to vector<1x32xf32>
    %383 = arith.mulf %381, %382 : vector<1x32xf32>
    %cst_73 = arith.constant 9.99999974E-6 : f32
    %384 = vector.broadcast %cst_73 : f32 to vector<1x32xf32>
    %385 = arith.addf %383, %384 : vector<1x32xf32>
    %386 = math.rsqrt %385 : vector<1x32xf32>
    %387 = vector.broadcast %386 : vector<1x32xf32> to vector<8x32xf32>
    %388 = arith.mulf %376, %387 : vector<8x32xf32>
    %389 = vector.broadcast %10 : vector<1x32xf32> to vector<8x32xf32>
    %390 = arith.mulf %388, %389 : vector<8x32xf32>
    %391 = vector.broadcast %11 : vector<1x32xf32> to vector<8x32xf32>
    %392 = arith.addf %390, %391 : vector<8x32xf32>
    %393 = vector.extract_strided_slice %312 {offsets = [8, 0], sizes = [8, 128], strides = [1, 1]} : vector<40x128xf32> to vector<8x128xf32>
    %394 = arith.addf %393, %315 : vector<8x128xf32>
    %cst_74 = arith.constant dense<0.000000e+00> : vector<8x128xf32>
    %395 = tpu.matmul %392, %4, %cst_74 {dimension_numbers = #tpu.dot_dimension_numbers<[1], [0], [0], [1], [0, 0, 1, 1], [], []>} : vector<8x32xf32>, vector<32x128xf32>, vector<8x128xf32> -> vector<8x128xf32>
    %396 = vector.broadcast %8 : vector<1x128xf32> to vector<8x128xf32>
    %397 = arith.addf %395, %396 : vector<8x128xf32>
    %398 = vector.extract_strided_slice %394 {offsets = [0, 0], sizes = [8, 32], strides = [1, 1]} : vector<8x128xf32> to vector<8x32xf32>
    %399 = vector.extract_strided_slice %397 {offsets = [0, 0], sizes = [8, 32], strides = [1, 1]} : vector<8x128xf32> to vector<8x32xf32>
    %400 = arith.addf %398, %399 : vector<8x32xf32>
    %401 = arith.negf %400 : vector<8x32xf32>
    %402 = math.exp %401 : vector<8x32xf32>
    %cst_75 = arith.constant 1.000000e+00 : f32
    %403 = vector.broadcast %cst_75 : f32 to vector<8x32xf32>
    %404 = arith.addf %403, %402 : vector<8x32xf32>
    %405 = arith.divf %403, %404 : vector<8x32xf32>
    %406 = vector.extract_strided_slice %394 {offsets = [0, 32], sizes = [8, 32], strides = [1, 1]} : vector<8x128xf32> to vector<8x32xf32>
    %407 = vector.extract_strided_slice %397 {offsets = [0, 32], sizes = [8, 32], strides = [1, 1]} : vector<8x128xf32> to vector<8x32xf32>
    %408 = arith.addf %406, %407 : vector<8x32xf32>
    %409 = arith.negf %408 : vector<8x32xf32>
    %410 = math.exp %409 : vector<8x32xf32>
    %cst_76 = arith.constant 1.000000e+00 : f32
    %411 = vector.broadcast %cst_76 : f32 to vector<8x32xf32>
    %412 = arith.addf %411, %410 : vector<8x32xf32>
    %413 = arith.divf %411, %412 : vector<8x32xf32>
    %414 = vector.extract_strided_slice %394 {offsets = [0, 64], sizes = [8, 32], strides = [1, 1]} : vector<8x128xf32> to vector<8x32xf32>
    %415 = vector.extract_strided_slice %397 {offsets = [0, 64], sizes = [8, 32], strides = [1, 1]} : vector<8x128xf32> to vector<8x32xf32>
    %416 = arith.mulf %405, %415 : vector<8x32xf32>
    %417 = arith.addf %414, %416 : vector<8x32xf32>
    %418 = math.tanh %417 : vector<8x32xf32>
    %cst_77 = arith.constant 1.000000e+00 : f32
    %419 = vector.broadcast %cst_77 : f32 to vector<8x32xf32>
    %420 = arith.subf %419, %413 : vector<8x32xf32>
    %421 = arith.mulf %420, %418 : vector<8x32xf32>
    %422 = arith.mulf %413, %392 : vector<8x32xf32>
    %423 = arith.addf %421, %422 : vector<8x32xf32>
    %424 = vector.broadcast %23 : vector<8x1xf32> to vector<8x32xf32>
    %425 = arith.mulf %423, %424 : vector<8x32xf32>
    %cst_78 = arith.constant dense<0.000000e+00> : vector<32xf32>
    %426 = vector.multi_reduction <add>, %425, %cst_78 [0] : vector<8x32xf32> to vector<32xf32>
    %427 = vector.shape_cast %426 : vector<32xf32> to vector<1x32xf32>
    %cst_79 = arith.constant 5.000000e-01 : f32
    %428 = vector.broadcast %cst_79 : f32 to vector<1x32xf32>
    %429 = arith.mulf %427, %428 : vector<1x32xf32>
    %430 = vector.broadcast %429 : vector<1x32xf32> to vector<8x32xf32>
    %431 = arith.subf %425, %430 : vector<8x32xf32>
    %432 = arith.mulf %431, %431 : vector<8x32xf32>
    %433 = vector.broadcast %23 : vector<8x1xf32> to vector<8x32xf32>
    %434 = arith.mulf %432, %433 : vector<8x32xf32>
    %cst_80 = arith.constant dense<0.000000e+00> : vector<32xf32>
    %435 = vector.multi_reduction <add>, %434, %cst_80 [0] : vector<8x32xf32> to vector<32xf32>
    %436 = vector.shape_cast %435 : vector<32xf32> to vector<1x32xf32>
    %cst_81 = arith.constant 5.000000e-01 : f32
    %437 = vector.broadcast %cst_81 : f32 to vector<1x32xf32>
    %438 = arith.mulf %436, %437 : vector<1x32xf32>
    %cst_82 = arith.constant 9.99999974E-6 : f32
    %439 = vector.broadcast %cst_82 : f32 to vector<1x32xf32>
    %440 = arith.addf %438, %439 : vector<1x32xf32>
    %441 = math.rsqrt %440 : vector<1x32xf32>
    %442 = vector.broadcast %441 : vector<1x32xf32> to vector<8x32xf32>
    %443 = arith.mulf %431, %442 : vector<8x32xf32>
    %444 = vector.broadcast %10 : vector<1x32xf32> to vector<8x32xf32>
    %445 = arith.mulf %443, %444 : vector<8x32xf32>
    %446 = vector.broadcast %11 : vector<1x32xf32> to vector<8x32xf32>
    %447 = arith.addf %445, %446 : vector<8x32xf32>
    %448 = vector.extract_strided_slice %312 {offsets = [16, 0], sizes = [8, 128], strides = [1, 1]} : vector<40x128xf32> to vector<8x128xf32>
    %449 = arith.addf %448, %315 : vector<8x128xf32>
    %cst_83 = arith.constant dense<0.000000e+00> : vector<8x128xf32>
    %450 = tpu.matmul %447, %4, %cst_83 {dimension_numbers = #tpu.dot_dimension_numbers<[1], [0], [0], [1], [0, 0, 1, 1], [], []>} : vector<8x32xf32>, vector<32x128xf32>, vector<8x128xf32> -> vector<8x128xf32>
    %451 = vector.broadcast %8 : vector<1x128xf32> to vector<8x128xf32>
    %452 = arith.addf %450, %451 : vector<8x128xf32>
    %453 = vector.extract_strided_slice %449 {offsets = [0, 0], sizes = [8, 32], strides = [1, 1]} : vector<8x128xf32> to vector<8x32xf32>
    %454 = vector.extract_strided_slice %452 {offsets = [0, 0], sizes = [8, 32], strides = [1, 1]} : vector<8x128xf32> to vector<8x32xf32>
    %455 = arith.addf %453, %454 : vector<8x32xf32>
    %456 = arith.negf %455 : vector<8x32xf32>
    %457 = math.exp %456 : vector<8x32xf32>
    %cst_84 = arith.constant 1.000000e+00 : f32
    %458 = vector.broadcast %cst_84 : f32 to vector<8x32xf32>
    %459 = arith.addf %458, %457 : vector<8x32xf32>
    %460 = arith.divf %458, %459 : vector<8x32xf32>
    %461 = vector.extract_strided_slice %449 {offsets = [0, 32], sizes = [8, 32], strides = [1, 1]} : vector<8x128xf32> to vector<8x32xf32>
    %462 = vector.extract_strided_slice %452 {offsets = [0, 32], sizes = [8, 32], strides = [1, 1]} : vector<8x128xf32> to vector<8x32xf32>
    %463 = arith.addf %461, %462 : vector<8x32xf32>
    %464 = arith.negf %463 : vector<8x32xf32>
    %465 = math.exp %464 : vector<8x32xf32>
    %cst_85 = arith.constant 1.000000e+00 : f32
    %466 = vector.broadcast %cst_85 : f32 to vector<8x32xf32>
    %467 = arith.addf %466, %465 : vector<8x32xf32>
    %468 = arith.divf %466, %467 : vector<8x32xf32>
    %469 = vector.extract_strided_slice %449 {offsets = [0, 64], sizes = [8, 32], strides = [1, 1]} : vector<8x128xf32> to vector<8x32xf32>
    %470 = vector.extract_strided_slice %452 {offsets = [0, 64], sizes = [8, 32], strides = [1, 1]} : vector<8x128xf32> to vector<8x32xf32>
    %471 = arith.mulf %460, %470 : vector<8x32xf32>
    %472 = arith.addf %469, %471 : vector<8x32xf32>
    %473 = math.tanh %472 : vector<8x32xf32>
    %cst_86 = arith.constant 1.000000e+00 : f32
    %474 = vector.broadcast %cst_86 : f32 to vector<8x32xf32>
    %475 = arith.subf %474, %468 : vector<8x32xf32>
    %476 = arith.mulf %475, %473 : vector<8x32xf32>
    %477 = arith.mulf %468, %447 : vector<8x32xf32>
    %478 = arith.addf %476, %477 : vector<8x32xf32>
    %479 = vector.broadcast %23 : vector<8x1xf32> to vector<8x32xf32>
    %480 = arith.mulf %478, %479 : vector<8x32xf32>
    %cst_87 = arith.constant dense<0.000000e+00> : vector<32xf32>
    %481 = vector.multi_reduction <add>, %480, %cst_87 [0] : vector<8x32xf32> to vector<32xf32>
    %482 = vector.shape_cast %481 : vector<32xf32> to vector<1x32xf32>
    %cst_88 = arith.constant 5.000000e-01 : f32
    %483 = vector.broadcast %cst_88 : f32 to vector<1x32xf32>
    %484 = arith.mulf %482, %483 : vector<1x32xf32>
    %485 = vector.broadcast %484 : vector<1x32xf32> to vector<8x32xf32>
    %486 = arith.subf %480, %485 : vector<8x32xf32>
    %487 = arith.mulf %486, %486 : vector<8x32xf32>
    %488 = vector.broadcast %23 : vector<8x1xf32> to vector<8x32xf32>
    %489 = arith.mulf %487, %488 : vector<8x32xf32>
    %cst_89 = arith.constant dense<0.000000e+00> : vector<32xf32>
    %490 = vector.multi_reduction <add>, %489, %cst_89 [0] : vector<8x32xf32> to vector<32xf32>
    %491 = vector.shape_cast %490 : vector<32xf32> to vector<1x32xf32>
    %cst_90 = arith.constant 5.000000e-01 : f32
    %492 = vector.broadcast %cst_90 : f32 to vector<1x32xf32>
    %493 = arith.mulf %491, %492 : vector<1x32xf32>
    %cst_91 = arith.constant 9.99999974E-6 : f32
    %494 = vector.broadcast %cst_91 : f32 to vector<1x32xf32>
    %495 = arith.addf %493, %494 : vector<1x32xf32>
    %496 = math.rsqrt %495 : vector<1x32xf32>
    %497 = vector.broadcast %496 : vector<1x32xf32> to vector<8x32xf32>
    %498 = arith.mulf %486, %497 : vector<8x32xf32>
    %499 = vector.broadcast %10 : vector<1x32xf32> to vector<8x32xf32>
    %500 = arith.mulf %498, %499 : vector<8x32xf32>
    %501 = vector.broadcast %11 : vector<1x32xf32> to vector<8x32xf32>
    %502 = arith.addf %500, %501 : vector<8x32xf32>
    %503 = vector.extract_strided_slice %312 {offsets = [24, 0], sizes = [8, 128], strides = [1, 1]} : vector<40x128xf32> to vector<8x128xf32>
    %504 = arith.addf %503, %315 : vector<8x128xf32>
    %cst_92 = arith.constant dense<0.000000e+00> : vector<8x128xf32>
    %505 = tpu.matmul %502, %4, %cst_92 {dimension_numbers = #tpu.dot_dimension_numbers<[1], [0], [0], [1], [0, 0, 1, 1], [], []>} : vector<8x32xf32>, vector<32x128xf32>, vector<8x128xf32> -> vector<8x128xf32>
    %506 = vector.broadcast %8 : vector<1x128xf32> to vector<8x128xf32>
    %507 = arith.addf %505, %506 : vector<8x128xf32>
    %508 = vector.extract_strided_slice %504 {offsets = [0, 0], sizes = [8, 32], strides = [1, 1]} : vector<8x128xf32> to vector<8x32xf32>
    %509 = vector.extract_strided_slice %507 {offsets = [0, 0], sizes = [8, 32], strides = [1, 1]} : vector<8x128xf32> to vector<8x32xf32>
    %510 = arith.addf %508, %509 : vector<8x32xf32>
    %511 = arith.negf %510 : vector<8x32xf32>
    %512 = math.exp %511 : vector<8x32xf32>
    %cst_93 = arith.constant 1.000000e+00 : f32
    %513 = vector.broadcast %cst_93 : f32 to vector<8x32xf32>
    %514 = arith.addf %513, %512 : vector<8x32xf32>
    %515 = arith.divf %513, %514 : vector<8x32xf32>
    %516 = vector.extract_strided_slice %504 {offsets = [0, 32], sizes = [8, 32], strides = [1, 1]} : vector<8x128xf32> to vector<8x32xf32>
    %517 = vector.extract_strided_slice %507 {offsets = [0, 32], sizes = [8, 32], strides = [1, 1]} : vector<8x128xf32> to vector<8x32xf32>
    %518 = arith.addf %516, %517 : vector<8x32xf32>
    %519 = arith.negf %518 : vector<8x32xf32>
    %520 = math.exp %519 : vector<8x32xf32>
    %cst_94 = arith.constant 1.000000e+00 : f32
    %521 = vector.broadcast %cst_94 : f32 to vector<8x32xf32>
    %522 = arith.addf %521, %520 : vector<8x32xf32>
    %523 = arith.divf %521, %522 : vector<8x32xf32>
    %524 = vector.extract_strided_slice %504 {offsets = [0, 64], sizes = [8, 32], strides = [1, 1]} : vector<8x128xf32> to vector<8x32xf32>
    %525 = vector.extract_strided_slice %507 {offsets = [0, 64], sizes = [8, 32], strides = [1, 1]} : vector<8x128xf32> to vector<8x32xf32>
    %526 = arith.mulf %515, %525 : vector<8x32xf32>
    %527 = arith.addf %524, %526 : vector<8x32xf32>
    %528 = math.tanh %527 : vector<8x32xf32>
    %cst_95 = arith.constant 1.000000e+00 : f32
    %529 = vector.broadcast %cst_95 : f32 to vector<8x32xf32>
    %530 = arith.subf %529, %523 : vector<8x32xf32>
    %531 = arith.mulf %530, %528 : vector<8x32xf32>
    %532 = arith.mulf %523, %502 : vector<8x32xf32>
    %533 = arith.addf %531, %532 : vector<8x32xf32>
    %534 = vector.broadcast %23 : vector<8x1xf32> to vector<8x32xf32>
    %535 = arith.mulf %533, %534 : vector<8x32xf32>
    %cst_96 = arith.constant dense<0.000000e+00> : vector<32xf32>
    %536 = vector.multi_reduction <add>, %535, %cst_96 [0] : vector<8x32xf32> to vector<32xf32>
    %537 = vector.shape_cast %536 : vector<32xf32> to vector<1x32xf32>
    %cst_97 = arith.constant 5.000000e-01 : f32
    %538 = vector.broadcast %cst_97 : f32 to vector<1x32xf32>
    %539 = arith.mulf %537, %538 : vector<1x32xf32>
    %540 = vector.broadcast %539 : vector<1x32xf32> to vector<8x32xf32>
    %541 = arith.subf %535, %540 : vector<8x32xf32>
    %542 = arith.mulf %541, %541 : vector<8x32xf32>
    %543 = vector.broadcast %23 : vector<8x1xf32> to vector<8x32xf32>
    %544 = arith.mulf %542, %543 : vector<8x32xf32>
    %cst_98 = arith.constant dense<0.000000e+00> : vector<32xf32>
    %545 = vector.multi_reduction <add>, %544, %cst_98 [0] : vector<8x32xf32> to vector<32xf32>
    %546 = vector.shape_cast %545 : vector<32xf32> to vector<1x32xf32>
    %cst_99 = arith.constant 5.000000e-01 : f32
    %547 = vector.broadcast %cst_99 : f32 to vector<1x32xf32>
    %548 = arith.mulf %546, %547 : vector<1x32xf32>
    %cst_100 = arith.constant 9.99999974E-6 : f32
    %549 = vector.broadcast %cst_100 : f32 to vector<1x32xf32>
    %550 = arith.addf %548, %549 : vector<1x32xf32>
    %551 = math.rsqrt %550 : vector<1x32xf32>
    %552 = vector.broadcast %551 : vector<1x32xf32> to vector<8x32xf32>
    %553 = arith.mulf %541, %552 : vector<8x32xf32>
    %554 = vector.broadcast %10 : vector<1x32xf32> to vector<8x32xf32>
    %555 = arith.mulf %553, %554 : vector<8x32xf32>
    %556 = vector.broadcast %11 : vector<1x32xf32> to vector<8x32xf32>
    %557 = arith.addf %555, %556 : vector<8x32xf32>
    %558 = vector.extract_strided_slice %312 {offsets = [32, 0], sizes = [8, 128], strides = [1, 1]} : vector<40x128xf32> to vector<8x128xf32>
    %559 = arith.addf %558, %315 : vector<8x128xf32>
    %cst_101 = arith.constant dense<0.000000e+00> : vector<8x128xf32>
    %560 = tpu.matmul %557, %4, %cst_101 {dimension_numbers = #tpu.dot_dimension_numbers<[1], [0], [0], [1], [0, 0, 1, 1], [], []>} : vector<8x32xf32>, vector<32x128xf32>, vector<8x128xf32> -> vector<8x128xf32>
    %561 = vector.broadcast %8 : vector<1x128xf32> to vector<8x128xf32>
    %562 = arith.addf %560, %561 : vector<8x128xf32>
    %563 = vector.extract_strided_slice %559 {offsets = [0, 0], sizes = [8, 32], strides = [1, 1]} : vector<8x128xf32> to vector<8x32xf32>
    %564 = vector.extract_strided_slice %562 {offsets = [0, 0], sizes = [8, 32], strides = [1, 1]} : vector<8x128xf32> to vector<8x32xf32>
    %565 = arith.addf %563, %564 : vector<8x32xf32>
    %566 = arith.negf %565 : vector<8x32xf32>
    %567 = math.exp %566 : vector<8x32xf32>
    %cst_102 = arith.constant 1.000000e+00 : f32
    %568 = vector.broadcast %cst_102 : f32 to vector<8x32xf32>
    %569 = arith.addf %568, %567 : vector<8x32xf32>
    %570 = arith.divf %568, %569 : vector<8x32xf32>
    %571 = vector.extract_strided_slice %559 {offsets = [0, 32], sizes = [8, 32], strides = [1, 1]} : vector<8x128xf32> to vector<8x32xf32>
    %572 = vector.extract_strided_slice %562 {offsets = [0, 32], sizes = [8, 32], strides = [1, 1]} : vector<8x128xf32> to vector<8x32xf32>
    %573 = arith.addf %571, %572 : vector<8x32xf32>
    %574 = arith.negf %573 : vector<8x32xf32>
    %575 = math.exp %574 : vector<8x32xf32>
    %cst_103 = arith.constant 1.000000e+00 : f32
    %576 = vector.broadcast %cst_103 : f32 to vector<8x32xf32>
    %577 = arith.addf %576, %575 : vector<8x32xf32>
    %578 = arith.divf %576, %577 : vector<8x32xf32>
    %579 = vector.extract_strided_slice %559 {offsets = [0, 64], sizes = [8, 32], strides = [1, 1]} : vector<8x128xf32> to vector<8x32xf32>
    %580 = vector.extract_strided_slice %562 {offsets = [0, 64], sizes = [8, 32], strides = [1, 1]} : vector<8x128xf32> to vector<8x32xf32>
    %581 = arith.mulf %570, %580 : vector<8x32xf32>
    %582 = arith.addf %579, %581 : vector<8x32xf32>
    %583 = math.tanh %582 : vector<8x32xf32>
    %cst_104 = arith.constant 1.000000e+00 : f32
    %584 = vector.broadcast %cst_104 : f32 to vector<8x32xf32>
    %585 = arith.subf %584, %578 : vector<8x32xf32>
    %586 = arith.mulf %585, %583 : vector<8x32xf32>
    %587 = arith.mulf %578, %557 : vector<8x32xf32>
    %588 = arith.addf %586, %587 : vector<8x32xf32>
    %589 = vector.broadcast %23 : vector<8x1xf32> to vector<8x32xf32>
    %590 = arith.mulf %588, %589 : vector<8x32xf32>
    %591 = tpu.concatenate %370, %425, %480, %535, %590 in 0 : vector<8x32xf32>, vector<8x32xf32>, vector<8x32xf32>, vector<8x32xf32>, vector<8x32xf32> -> vector<40x32xf32>
    %cst_105 = arith.constant dense<0.000000e+00> : vector<40x128xf32>
    %592 = tpu.matmul %591, %5, %cst_105 {dimension_numbers = #tpu.dot_dimension_numbers<[1], [0], [0], [1], [0, 0, 1, 1], [], []>} : vector<40x32xf32>, vector<32x128xf32>, vector<40x128xf32> -> vector<40x128xf32>
    %593 = vector.broadcast %9 : vector<1x128xf32> to vector<40x128xf32>
    %594 = arith.addf %592, %593 : vector<40x128xf32>
    %c0_106 = arith.constant 0 : index
    %c0_107 = arith.constant 0 : index
    %595 = vector.load %arg2[%c0_106, %c0_107] : memref<48x128xf32, #tpu.memory_space<vmem>>, vector<40x128xf32>
    tpu.vector_store %arg2[%c0_106, %c0_107], %594 {strides = array<i32>} : memref<48x128xf32, #tpu.memory_space<vmem>>, vector<40x128xf32>,
    %cst_108 = arith.constant 0.000000e+00 : f32
    %596 = vector.broadcast %cst_108 : f32 to vector<8x128xf32>
    %c40 = arith.constant 40 : index
    %c0_109 = arith.constant 0 : index
    %597 = vector.load %arg2[%c40, %c0_109] : memref<48x128xf32, #tpu.memory_space<vmem>>, vector<8x128xf32>
    tpu.vector_store %arg2[%c40, %c0_109], %596 {strides = array<i32>} : memref<48x128xf32, #tpu.memory_space<vmem>>, vector<8x128xf32>,
    %c40_110 = arith.constant 40 : index
    %c0_111 = arith.constant 0 : index
    %598 = vector.load %arg2[%c40_110, %c0_111] : memref<48x128xf32, #tpu.memory_space<vmem>>, vector<8x32xf32>
    tpu.vector_store %arg2[%c40_110, %c0_111], %590 {strides = array<i32>} : memref<48x128xf32, #tpu.memory_space<vmem>>, vector<8x32xf32>,
    return
  }
}

</mosaic_0001>

<llo_original>
// kernel: neural_parser_forward_device.1
$region0: #{neural_parser_forward_device.1}
  #allocation0 [shape = 'u32[]', space=smem, size = 0x4, offset = 0x4, fixed_abs, tag = 'smem constant byte address 0x4 - core index']
  #allocation1 [shape = 'u32[144,128]{1,0:T(1,128)}', space=vmem, size = 0x12000, scoped, tag = 'internal scratch']
  %s0 = inlined_call_operand.vmem [shape: f32[240,128], index: 0, kind: input, shape index: {}]
  %s1 = inlined_call_operand.vmem [shape: f32[112,64], index: 1, kind: input, shape index: {}]
  %s2 = inlined_call_operand.vmem [shape: f32[48,128], index: 2, kind: output, shape index: {}]
  %s3 = sld [smem:[#allocation0]]
  $region18: #{neural_parser_forward_device.1} parent=0
    _
  %s5 = ssub.s32 1, %s3
  %s6 = scalar_select 0, %s5, %s3
  // Predicated region
  $region2: #{neural_parser_forward_device.1} parent=0 // pred_check
    _
  $region3: #{neural_parser_forward_device.1} parent=0 // pred_check_branch
    %8 = sbr.rel (0) target = $region5
  $region4: #{neural_parser_forward_device.1} parent=0 // pred_region
    _
  $region5: #{neural_parser_forward_device.1} parent=0 // pred_fallthru
    _
  // Predicated region
  $region6: #{neural_parser_forward_device.1} parent=0 // pred_check
    _
  $region7: #{neural_parser_forward_device.1} parent=0 // pred_check_branch
    %10 = sbr.rel (0) target = $region9
  $region8: #{neural_parser_forward_device.1} parent=0 // pred_region
    _
  $region9: #{neural_parser_forward_device.1} parent=0 // pred_fallthru
    _
  %v11 = vld [vmem:[%s0] sm:$0xff]
  %v12 = vld [vmem:[%s0 + $0x8] sm:$0xff]
  %v13 = vld [vmem:[%s0 + $0x10] sm:$0xff]
  %v14 = vld [vmem:[%s0 + $0x18] sm:$0xff]
  %v15 = vld [vmem:[%s0 + $0x20] sm:$0xff]
  %v16 = vld [vmem:[%s0 + $0x28] sm:$0xff]
  %v17 = vld [vmem:[%s0 + $0x30] sm:$0xff]
  %v18 = vld [vmem:[%s0 + $0x38] sm:$0xff]
  %v19 = vld [vmem:[%s0 + $0x40] sm:$0xff]
  %v20 = vld [vmem:[%s0 + $0x48] sm:$0xff]
  %v21 = vld [vmem:[%s0 + $0x50] sm:$0xff]
  %v22 = vld [vmem:[%s0 + $0x58] sm:$0xff]
  %v23 = vld [vmem:[%s0 + $0x60] sm:$0xff]
  %v24 = vld [vmem:[%s0 + $0x68] sm:$0xff]
  %v25 = vld [vmem:[%s0 + $0x70] sm:$0xff]
  %v26 = vld [vmem:[%s0 + $0x78] sm:$0xff]
  %v27 = vld [vmem:[%s0 + $0x80] sm:$0xff]
  %v28 = vld [vmem:[%s0 + $0x88] sm:$0xff]
  %v29 = vld [vmem:[%s0 + $0x90] sm:$0xff]
  %v30 = vld [vmem:[%s0 + $0x98] sm:$0xff]
  %v31 = vld [vmem:[%s0 + $0xa0] sm:$0xff]
  %v32 = vld [vmem:[%s0 + $0xa8] sm:$0xff]
  %v33 = vld [vmem:[%s0 + $0xb0] sm:$0xff]
  %v34 = vld [vmem:[%s0 + $0xb8] sm:$0xff]
  %v35 = vld [vmem:[%s0 + $0xc0] sm:$0xff]
  %v36 = vld [vmem:[%s0 + $0xc8] sm:$0xff]
  %v37 = vld [vmem:[%s0 + $0xd0] sm:$0xff]
  %v38 = vld [vmem:[%s0 + $0xd8] sm:$0xff]
  %v39 = vld [vmem:[%s0 + $0xe0] sm:$0x1]
  %v40 = vld [vmem:[%s0 + $0xe1] sm:$0x1]
  %v41 = vld [vmem:[%s0 + $0xe2] sm:$0x1]
  %v42 = vld [vmem:[%s0 + $0xe3] sm:$0x1]
  %v43 = vld [vmem:[%s0 + $0xe4] sm:$0x1]
  %v44 = vld [vmem:[%s0 + $0xe5] sm:$0x1]
  %v45 = vld [vmem:[%s0 + $0xe8] sm:$0xff]
  %v46 = vld [vmem:[%s1] sm:$0xff]
  %v47 = vld [vmem:[%s1 + $0x8] sm:$0xff]
  %v48 = vld [vmem:[%s1 + $0x10] sm:$0xff]
  %v49 = vld [vmem:[%s1 + $0x18] sm:$0xff]
  %v50 = vld [vmem:[%s1 + $0x20] sm:$0xff]
  %v51 = vld [vmem:[%s1 + $0x28] sm:$0xff]
  %v52 = vld [vmem:[%s1 + $0x30] sm:$0xff]
  %v53 = vld [vmem:[%s1 + $0x38] sm:$0xff]
  %v54 = vld [vmem:[%s1 + $0x40] sm:$0xff]
  %v55 = vld [vmem:[%s1 + $0x48] sm:$0xff]
  %v56 = vld [vmem:[%s1 + $0x50] sm:$0xff]
  %v57 = vld [vmem:[%s1 + $0x58] sm:$0xff]
  %v58 = vld [vmem:[%s1 + $0x60] sm:$0xff]
  %v59 = vld [vmem:[%s1 + $0x68] sm:$0xff]
  %v60 = vlaneseq
  %v61 = vshrl.u32 %v60, 7
  %vm62 = vcmp.lt.s32.totalorder %v61, 2
  %v63 = vsel %vm62, 1, 0
  %v64 = vcvt.s32.f32 %v63
  %v65 = vlaneseq
  %v66 = vshrl.u32 %v65, 7
  %v67 = vsub.s32 0, %v66
  %v68 = vrot.slane %v39, %v67
  %vm69 = vcmask 261120
  %v71 = vsel %vm69, %v46, 0
  %v74 = vsel %vm69, %v47, 0
  %v77 = vsel %vm69, %v48, 0
  %v80 = vsel %vm69, %v49, 0
  %v83 = vsel %vm69, %v50, 0
  %v86 = vsel %vm69, %v51, 0
  %v89 = vsel %vm69, %v52, 0
  %v92 = vsel %vm69, %v53, 0
  %94 = vmatprep.subr.mxu0 0.0
  %95 = vmatpush1.msra.mxu0 %v11
  %96 = vmatprep.subr.mxu0 0.0
  %97 = vmatpush1.msra.mxu0 %v12
  %98 = vmatprep.subr.mxu0 0.0
  %99 = vmatpush1.msra.mxu0 %v13
  %100 = vmatprep.subr.mxu0 0.0
  %101 = vmatpush1.msra.mxu0 %v14
  %102 = vmatprep.subr.mxu0 0.0
  %103 = vmatpush1.msra.mxu0 0.0
  %104 = vmatprep.subr.mxu0 0.0
  %105 = vmatpush1.msra.mxu0 0.0
  %106 = vmatprep.subr.mxu0 0.0
  %107 = vmatpush1.msra.mxu0 0.0
  %108 = vmatprep.subr.mxu0 0.0
  %109 = vmatpush1.msra.mxu0 0.0
  %110 = vmatprep.subr.mxu0 0.0
  %111 = vmatpush1.msra.mxu0 0.0
  %112 = vmatprep.subr.mxu0 0.0
  %113 = vmatpush1.msra.mxu0 0.0
  %114 = vmatprep.subr.mxu0 0.0
  %115 = vmatpush1.msra.mxu0 0.0
  %116 = vmatprep.subr.mxu0 0.0
  %117 = vmatpush1.msra.mxu0 0.0
  %118 = vmatprep.subr.mxu0 0.0
  %119 = vmatpush1.msra.mxu0 0.0
  %120 = vmatprep.subr.mxu0 0.0
  %121 = vmatpush1.msra.mxu0 0.0
  %122 = vmatprep.subr.mxu0 0.0
  %123 = vmatpush1.msra.mxu0 0.0
  %124 = vmatprep.subr.mxu0 0.0
  %125 = vmatpush1.msra.mxu0 0.0
  %126 = vmatprep.subr.mxu0 0.0
  %127 = vmatpush1.msra.mxu0 0.0
  %128 = vmatprep.subr.mxu0 0.0
  %129 = vmatpush1.msra.mxu0 0.0
  %130 = vmatprep.subr.mxu0 0.0
  %131 = vmatpush1.msra.mxu0 0.0
  %132 = vmatprep.subr.mxu0 0.0
  %133 = vmatpush1.msra.mxu0 0.0
  %134 = vmatprep.subr.mxu0 0.0
  %135 = vmatpush1.msra.mxu0 0.0
  %136 = vmatprep.subr.mxu0 0.0
  %137 = vmatpush1.msra.mxu0 0.0
  %138 = vmatprep.subr.mxu0 0.0
  %139 = vmatpush1.msra.mxu0 0.0
  %140 = vmatprep.subr.mxu0 0.0
  %141 = vmatpush1.msra.mxu0 0.0
  %142 = vmatprep.subr.mxu0 0.0
  %143 = vmatpush1.msra.mxu0 0.0
  %144 = vmatprep.subr.mxu0 0.0
  %145 = vmatpush1.msra.mxu0 0.0
  %146 = vmatprep.subr.mxu0 0.0
  %147 = vmatpush1.msra.mxu0 0.0
  %148 = vmatprep.subr.mxu0 0.0
  %149 = vmatpush1.msra.mxu0 0.0
  %150 = vmatprep.subr.mxu0 0.0
  %151 = vmatpush1.msra.mxu0 0.0
  %152 = vmatprep.subr.mxu0 0.0
  %153 = vmatpush1.msra.mxu0 0.0
  %154 = vmatprep.subr.mxu0 0.0
  %155 = vmatpush1.msra.mxu0 0.0
  %156 = vmatprep.subr.mxu0 0.0
  %157 = vmatpush1.msra.mxu0 0.0
  %158 = vmatprep.mubr.f32.mxu0 0.0
  %159 = vmatmul.mubr.f32.gmra.mrb[0].mxu0 %v71
  %v160 = vpop.f32.mrb[0].mxu0
  %v161 = vadd.f32 %v68, %v160
  %v162 = vpop.f32.mrb[0].mxu0
  %163 = vmatprep.mubr.f32.mxu0 0.0
  %164 = vmatmul.mubr.f32.gmra.mrb[0].mxu0 %v74
  %v165 = vpop.f32.mrb[0].mxu0
  %v166 = vadd.f32 %v68, %v165
  %v167 = vpop.f32.mrb[0].mxu0
  %168 = vmatprep.mubr.f32.mxu0 0.0
  %169 = vmatmul.mubr.f32.gmra.mrb[0].mxu0 %v77
  %v170 = vpop.f32.mrb[0].mxu0
  %v171 = vadd.f32 %v68, %v170
  %v172 = vpop.f32.mrb[0].mxu0
  %173 = vmatprep.mubr.f32.mxu0 0.0
  %174 = vmatmul.mubr.f32.gmra.mrb[0].mxu0 %v80
  %v175 = vpop.f32.mrb[0].mxu0
  %v176 = vadd.f32 %v68, %v175
  %v177 = vpop.f32.mrb[0].mxu0
  %178 = vmatprep.mubr.f32.mxu0 0.0
  %179 = vmatmul.mubr.f32.gmra.mrb[0].mxu0 %v83
  %v180 = vpop.f32.mrb[0].mxu0
  %v181 = vadd.f32 %v68, %v180
  %v182 = vpop.f32.mrb[0].mxu0
  %183 = vmatprep.mubr.f32.mxu0 0.0
  %184 = vmatmul.mubr.f32.gmra.mrb[0].mxu0 %v86
  %v185 = vpop.f32.mrb[0].mxu0
  %v186 = vadd.f32 %v68, %v185
  %v187 = vpop.f32.mrb[0].mxu0
  %188 = vmatprep.mubr.f32.mxu0 0.0
  %189 = vmatmul.mubr.f32.gmra.mrb[0].mxu0 %v89
  %v190 = vpop.f32.mrb[0].mxu0
  %v191 = vadd.f32 %v68, %v190
  %v192 = vpop.f32.mrb[0].mxu0
  %193 = vmatprep.mubr.f32.mxu0 0.0
  %194 = vmatmul.mubr.f32.gmra.mrb[0].mxu0 %v92
  %v195 = vpop.f32.mrb[0].mxu0
  %v196 = vadd.f32 %v68, %v195
  %v197 = vpop.f32.mrb[0].mxu0
  %198 = vdwg.mxu0
  %v200 = vsel %vm69, %v45, 0
  %202 = vmatprep.subr.mxu0 0.0
  %203 = vmatpush1.msra.mxu0 %v15
  %204 = vmatprep.subr.mxu0 0.0
  %205 = vmatpush1.msra.mxu0 %v16
  %206 = vmatprep.subr.mxu0 0.0
  %207 = vmatpush1.msra.mxu0 %v17
  %208 = vmatprep.subr.mxu0 0.0
  %209 = vmatpush1.msra.mxu0 %v18
  %210 = vmatprep.subr.mxu0 0.0
  %211 = vmatpush1.msra.mxu0 0.0
  %212 = vmatprep.subr.mxu0 0.0
  %213 = vmatpush1.msra.mxu0 0.0
  %214 = vmatprep.subr.mxu0 0.0
  %215 = vmatpush1.msra.mxu0 0.0
  %216 = vmatprep.subr.mxu0 0.0
  %217 = vmatpush1.msra.mxu0 0.0
  %218 = vmatprep.subr.mxu0 0.0
  %219 = vmatpush1.msra.mxu0 0.0
  %220 = vmatprep.subr.mxu0 0.0
  %221 = vmatpush1.msra.mxu0 0.0
  %222 = vmatprep.subr.mxu0 0.0
  %223 = vmatpush1.msra.mxu0 0.0
  %224 = vmatprep.subr.mxu0 0.0
  %225 = vmatpush1.msra.mxu0 0.0
  %226 = vmatprep.subr.mxu0 0.0
  %227 = vmatpush1.msra.mxu0 0.0
  %228 = vmatprep.subr.mxu0 0.0
  %229 = vmatpush1.msra.mxu0 0.0
  %230 = vmatprep.subr.mxu0 0.0
  %231 = vmatpush1.msra.mxu0 0.0
  %232 = vmatprep.subr.mxu0 0.0
  %233 = vmatpush1.msra.mxu0 0.0
  %234 = vmatprep.subr.mxu0 0.0
  %235 = vmatpush1.msra.mxu0 0.0
  %236 = vmatprep.subr.mxu0 0.0
  %237 = vmatpush1.msra.mxu0 0.0
  %238 = vmatprep.subr.mxu0 0.0
  %239 = vmatpush1.msra.mxu0 0.0
  %240 = vmatprep.subr.mxu0 0.0
  %241 = vmatpush1.msra.mxu0 0.0
  %242 = vmatprep.subr.mxu0 0.0
  %243 = vmatpush1.msra.mxu0 0.0
  %244 = vmatprep.subr.mxu0 0.0
  %245 = vmatpush1.msra.mxu0 0.0
  %246 = vmatprep.subr.mxu0 0.0
  %247 = vmatpush1.msra.mxu0 0.0
  %248 = vmatprep.subr.mxu0 0.0
  %249 = vmatpush1.msra.mxu0 0.0
  %250 = vmatprep.subr.mxu0 0.0
  %251 = vmatpush1.msra.mxu0 0.0
  %252 = vmatprep.subr.mxu0 0.0
  %253 = vmatpush1.msra.mxu0 0.0
  %254 = vmatprep.subr.mxu0 0.0
  %255 = vmatpush1.msra.mxu0 0.0
  %256 = vmatprep.subr.mxu0 0.0
  %257 = vmatpush1.msra.mxu0 0.0
  %258 = vmatprep.subr.mxu0 0.0
  %259 = vmatpush1.msra.mxu0 0.0
  %260 = vmatprep.subr.mxu0 0.0
  %261 = vmatpush1.msra.mxu0 0.0
  %262 = vmatprep.subr.mxu0 0.0
  %263 = vmatpush1.msra.mxu0 0.0
  %264 = vmatprep.subr.mxu0 0.0
  %265 = vmatpush1.msra.mxu0 0.0
  %266 = vmatprep.mubr.f32.mxu0 0.0
  %267 = vmatmul.mubr.f32.gmra.mrb[0].mxu0 %v200
  %v268 = vpop.f32.mrb[0].mxu0
  %v269 = vadd.f32 0.0, %v268
  %v270 = vpop.f32.mrb[0].mxu0
  %271 = vdwg.mxu0
  %v272 = vadd.f32 %v161, %v269
  %v273 = vxor.u32 %v272, 2147483648
  %v274 = vmul.f32 %v273, 1.442695
  %v275 = vpow.pop %v274
  %v276 = vadd.f32 %v275, 1.0
  %v277 = vrcp.pop %v276
  %v278 = vmul.f32 1.0, %v277
  %v279 = vtanh.pop %v272
  %v280 = vmul.f32 %v278, %v45
  %282 = vrot.lane.b32.xlu0 %v279, 64
  %v283 = vpop.permute.xlu0 %282
  %v285 = vmul.f32 %v278, %v283
  %287 = vrot.lane.b32.xlu0 %v285, 32
  %v288 = vpop.permute.xlu0 %287
  %v290 = vadd.f32 %v280, %v288
  %v291 = vtanh.pop %v290
  %293 = vrot.lane.b32.xlu0 %v291, 64
  %v294 = vpop.permute.xlu0 %293
  %v296 = vmul.f32 %v278, %v294
  %vm297 = vcmp.gt.f32.partialorder %v59, 0.0
  %v298 = vsel %vm297, 1, 0
  %299 = vset.pattern.permute.xlu0 0
  %300 = vperm.xlu0 %299, %v298
  %v301 = vpop.permute.xlu0 %300
  %vm302 = vcmp.eq.s32.totalorder %v301, 1
  %303 = vrot.lane.b32.xlu0 %v45, 96
  %v304 = vpop.permute.xlu0 %303
  %v306 = vsel %vm302, %v296, %v304
  %v307 = vsel %vm302, %v290, %v45
  %309 = vrot.lane.b32.xlu0 %v306, 32
  %v310 = vpop.permute.xlu0 %309
  %v311 = vsel %vm69, %v310, 0
  %313 = vmatprep.subr.mxu0 0.0
  %314 = vmatpush1.msra.mxu0 %v15
  %315 = vmatprep.subr.mxu0 0.0
  %316 = vmatpush1.msra.mxu0 %v16
  %317 = vmatprep.subr.mxu0 0.0
  %318 = vmatpush1.msra.mxu0 %v17
  %319 = vmatprep.subr.mxu0 0.0
  %320 = vmatpush1.msra.mxu0 %v18
  %321 = vmatprep.subr.mxu0 0.0
  %322 = vmatpush1.msra.mxu0 0.0
  %323 = vmatprep.subr.mxu0 0.0
  %324 = vmatpush1.msra.mxu0 0.0
  %325 = vmatprep.subr.mxu0 0.0
  %326 = vmatpush1.msra.mxu0 0.0
  %327 = vmatprep.subr.mxu0 0.0
  %328 = vmatpush1.msra.mxu0 0.0
  %329 = vmatprep.subr.mxu0 0.0
  %330 = vmatpush1.msra.mxu0 0.0
  %331 = vmatprep.subr.mxu0 0.0
  %332 = vmatpush1.msra.mxu0 0.0
  %333 = vmatprep.subr.mxu0 0.0
  %334 = vmatpush1.msra.mxu0 0.0
  %335 = vmatprep.subr.mxu0 0.0
  %336 = vmatpush1.msra.mxu0 0.0
  %337 = vmatprep.subr.mxu0 0.0
  %338 = vmatpush1.msra.mxu0 0.0
  %339 = vmatprep.subr.mxu0 0.0
  %340 = vmatpush1.msra.mxu0 0.0
  %341 = vmatprep.subr.mxu0 0.0
  %342 = vmatpush1.msra.mxu0 0.0
  %343 = vmatprep.subr.mxu0 0.0
  %344 = vmatpush1.msra.mxu0 0.0
  %345 = vmatprep.subr.mxu0 0.0
  %346 = vmatpush1.msra.mxu0 0.0
  %347 = vmatprep.subr.mxu0 0.0
  %348 = vmatpush1.msra.mxu0 0.0
  %349 = vmatprep.subr.mxu0 0.0
  %350 = vmatpush1.msra.mxu0 0.0
  %351 = vmatprep.subr.mxu0 0.0
  %352 = vmatpush1.msra.mxu0 0.0
  %353 = vmatprep.subr.mxu0 0.0
  %354 = vmatpush1.msra.mxu0 0.0
  %355 = vmatprep.subr.mxu0 0.0
  %356 = vmatpush1.msra.mxu0 0.0
  %357 = vmatprep.subr.mxu0 0.0
  %358 = vmatpush1.msra.mxu0 0.0
  %359 = vmatprep.subr.mxu0 0.0
  %360 = vmatpush1.msra.mxu0 0.0
  %361 = vmatprep.subr.mxu0 0.0
  %362 = vmatpush1.msra.mxu0 0.0
  %363 = vmatprep.subr.mxu0 0.0
  %364 = vmatpush1.msra.mxu0 0.0
  %365 = vmatprep.subr.mxu0 0.0
  %366 = vmatpush1.msra.mxu0 0.0
  %367 = vmatprep.subr.mxu0 0.0
  %368 = vmatpush1.msra.mxu0 0.0
  %369 = vmatprep.subr.mxu0 0.0
  %370 = vmatpush1.msra.mxu0 0.0
  %371 = vmatprep.subr.mxu0 0.0
  %372 = vmatpush1.msra.mxu0 0.0
  %373 = vmatprep.subr.mxu0 0.0
  %374 = vmatpush1.msra.mxu0 0.0
  %375 = vmatprep.subr.mxu0 0.0
  %376 = vmatpush1.msra.mxu0 0.0
  %377 = vmatprep.mubr.f32.mxu0 0.0
  %378 = vmatmul.mubr.f32.gmra.mrb[0].mxu0 %v311
  %v379 = vpop.f32.mrb[0].mxu0
  %v380 = vadd.f32 0.0, %v379
  %v381 = vpop.f32.mrb[0].mxu0
  %382 = vdwg.mxu0
  %v383 = vadd.f32 %v166, %v380
  %v384 = vxor.u32 %v383, 2147483648
  %v385 = vmul.f32 %v384, 1.442695
  %v386 = vpow.pop %v385
  %v387 = vadd.f32 %v386, 1.0
  %v388 = vrcp.pop %v387
  %v389 = vmul.f32 1.0, %v388
  %v390 = vtanh.pop %v383
  %v391 = vmul.f32 %v389, %v307
  %393 = vrot.lane.b32.xlu0 %v390, 64
  %v394 = vpop.permute.xlu0 %393
  %v396 = vmul.f32 %v389, %v394
  %398 = vrot.lane.b32.xlu0 %v396, 32
  %v399 = vpop.permute.xlu0 %398
  %v401 = vadd.f32 %v391, %v399
  %v402 = vtanh.pop %v401
  %404 = vrot.lane.b32.xlu0 %v402, 64
  %v405 = vpop.permute.xlu0 %404
  %v407 = vmul.f32 %v389, %v405
  %vm408 = vcmp.gt.f32.partialorder %v59, 1.0
  %v409 = vsel %vm408, 1, 0
  %410 = vset.pattern.permute.xlu0 0
  %411 = vperm.xlu0 %410, %v409
  %v412 = vpop.permute.xlu0 %411
  %vm413 = vcmp.eq.s32.totalorder %v412, 1
  %v414 = vsel %vm413, %v407, %v306
  %v415 = vsel %vm413, %v401, %v307
  %417 = vrot.lane.b32.xlu0 %v414, 32
  %v418 = vpop.permute.xlu0 %417
  %v419 = vsel %vm69, %v418, 0
  %421 = vmatprep.subr.mxu0 0.0
  %422 = vmatpush1.msra.mxu0 %v15
  %423 = vmatprep.subr.mxu0 0.0
  %424 = vmatpush1.msra.mxu0 %v16
  %425 = vmatprep.subr.mxu0 0.0
  %426 = vmatpush1.msra.mxu0 %v17
  %427 = vmatprep.subr.mxu0 0.0
  %428 = vmatpush1.msra.mxu0 %v18
  %429 = vmatprep.subr.mxu0 0.0
  %430 = vmatpush1.msra.mxu0 0.0
  %431 = vmatprep.subr.mxu0 0.0
  %432 = vmatpush1.msra.mxu0 0.0
  %433 = vmatprep.subr.mxu0 0.0
  %434 = vmatpush1.msra.mxu0 0.0
  %435 = vmatprep.subr.mxu0 0.0
  %436 = vmatpush1.msra.mxu0 0.0
  %437 = vmatprep.subr.mxu0 0.0
  %438 = vmatpush1.msra.mxu0 0.0
  %439 = vmatprep.subr.mxu0 0.0
  %440 = vmatpush1.msra.mxu0 0.0
  %441 = vmatprep.subr.mxu0 0.0
  %442 = vmatpush1.msra.mxu0 0.0
  %443 = vmatprep.subr.mxu0 0.0
  %444 = vmatpush1.msra.mxu0 0.0
  %445 = vmatprep.subr.mxu0 0.0
  %446 = vmatpush1.msra.mxu0 0.0
  %447 = vmatprep.subr.mxu0 0.0
  %448 = vmatpush1.msra.mxu0 0.0
  %449 = vmatprep.subr.mxu0 0.0
  %450 = vmatpush1.msra.mxu0 0.0
  %451 = vmatprep.subr.mxu0 0.0
  %452 = vmatpush1.msra.mxu0 0.0
  %453 = vmatprep.subr.mxu0 0.0
  %454 = vmatpush1.msra.mxu0 0.0
  %455 = vmatprep.subr.mxu0 0.0
  %456 = vmatpush1.msra.mxu0 0.0
  %457 = vmatprep.subr.mxu0 0.0
  %458 = vmatpush1.msra.mxu0 0.0
  %459 = vmatprep.subr.mxu0 0.0
  %460 = vmatpush1.msra.mxu0 0.0
  %461 = vmatprep.subr.mxu0 0.0
  %462 = vmatpush1.msra.mxu0 0.0
  %463 = vmatprep.subr.mxu0 0.0
  %464 = vmatpush1.msra.mxu0 0.0
  %465 = vmatprep.subr.mxu0 0.0
  %466 = vmatpush1.msra.mxu0 0.0
  %467 = vmatprep.subr.mxu0 0.0
  %468 = vmatpush1.msra.mxu0 0.0
  %469 = vmatprep.subr.mxu0 0.0
  %470 = vmatpush1.msra.mxu0 0.0
  %471 = vmatprep.subr.mxu0 0.0
  %472 = vmatpush1.msra.mxu0 0.0
  %473 = vmatprep.subr.mxu0 0.0
  %474 = vmatpush1.msra.mxu0 0.0
  %475 = vmatprep.subr.mxu0 0.0
  %476 = vmatpush1.msra.mxu0 0.0
  %477 = vmatprep.subr.mxu0 0.0
  %478 = vmatpush1.msra.mxu0 0.0
  %479 = vmatprep.subr.mxu0 0.0
  %480 = vmatpush1.msra.mxu0 0.0
  %481 = vmatprep.subr.mxu0 0.0
  %482 = vmatpush1.msra.mxu0 0.0
  %483 = vmatprep.subr.mxu0 0.0
  %484 = vmatpush1.msra.mxu0 0.0
  %485 = vmatprep.mubr.f32.mxu0 0.0
  %486 = vmatmul.mubr.f32.gmra.mrb[0].mxu0 %v419
  %v487 = vpop.f32.mrb[0].mxu0
  %v488 = vadd.f32 0.0, %v487
  %v489 = vpop.f32.mrb[0].mxu0
  %490 = vdwg.mxu0
  %v491 = vadd.f32 %v171, %v488
  %v492 = vxor.u32 %v491, 2147483648
  %v493 = vmul.f32 %v492, 1.442695
  %v494 = vpow.pop %v493
  %v495 = vadd.f32 %v494, 1.0
  %v496 = vrcp.pop %v495
  %v497 = vmul.f32 1.0, %v496
  %v498 = vtanh.pop %v491
  %v499 = vmul.f32 %v497, %v415
  %501 = vrot.lane.b32.xlu0 %v498, 64
  %v502 = vpop.permute.xlu0 %501
  %v504 = vmul.f32 %v497, %v502
  %506 = vrot.lane.b32.xlu0 %v504, 32
  %v507 = vpop.permute.xlu0 %506
  %v509 = vadd.f32 %v499, %v507
  %v510 = vtanh.pop %v509
  %512 = vrot.lane.b32.xlu0 %v510, 64
  %v513 = vpop.permute.xlu0 %512
  %v515 = vmul.f32 %v497, %v513
  %vm516 = vcmp.gt.f32.partialorder %v59, 2.0
  %v517 = vsel %vm516, 1, 0
  %518 = vset.pattern.permute.xlu0 0
  %519 = vperm.xlu0 %518, %v517
  %v520 = vpop.permute.xlu0 %519
  %vm521 = vcmp.eq.s32.totalorder %v520, 1
  %v522 = vsel %vm521, %v515, %v414
  %v523 = vsel %vm521, %v509, %v415
  %525 = vrot.lane.b32.xlu0 %v522, 32
  %v526 = vpop.permute.xlu0 %525
  %v527 = vsel %vm69, %v526, 0
  %529 = vmatprep.subr.mxu0 0.0
  %530 = vmatpush1.msra.mxu0 %v15
  %531 = vmatprep.subr.mxu0 0.0
  %532 = vmatpush1.msra.mxu0 %v16
  %533 = vmatprep.subr.mxu0 0.0
  %534 = vmatpush1.msra.mxu0 %v17
  %535 = vmatprep.subr.mxu0 0.0
  %536 = vmatpush1.msra.mxu0 %v18
  %537 = vmatprep.subr.mxu0 0.0
  %538 = vmatpush1.msra.mxu0 0.0
  %539 = vmatprep.subr.mxu0 0.0
  %540 = vmatpush1.msra.mxu0 0.0
  %541 = vmatprep.subr.mxu0 0.0
  %542 = vmatpush1.msra.mxu0 0.0
  %543 = vmatprep.subr.mxu0 0.0
  %544 = vmatpush1.msra.mxu0 0.0
  %545 = vmatprep.subr.mxu0 0.0
  %546 = vmatpush1.msra.mxu0 0.0
  %547 = vmatprep.subr.mxu0 0.0
  %548 = vmatpush1.msra.mxu0 0.0
  %549 = vmatprep.subr.mxu0 0.0
  %550 = vmatpush1.msra.mxu0 0.0
  %551 = vmatprep.subr.mxu0 0.0
  %552 = vmatpush1.msra.mxu0 0.0
  %553 = vmatprep.subr.mxu0 0.0
  %554 = vmatpush1.msra.mxu0 0.0
  %555 = vmatprep.subr.mxu0 0.0
  %556 = vmatpush1.msra.mxu0 0.0
  %557 = vmatprep.subr.mxu0 0.0
  %558 = vmatpush1.msra.mxu0 0.0
  %559 = vmatprep.subr.mxu0 0.0
  %560 = vmatpush1.msra.mxu0 0.0
  %561 = vmatprep.subr.mxu0 0.0
  %562 = vmatpush1.msra.mxu0 0.0
  %563 = vmatprep.subr.mxu0 0.0
  %564 = vmatpush1.msra.mxu0 0.0
  %565 = vmatprep.subr.mxu0 0.0
  %566 = vmatpush1.msra.mxu0 0.0
  %567 = vmatprep.subr.mxu0 0.0
  %568 = vmatpush1.msra.mxu0 0.0
  %569 = vmatprep.subr.mxu0 0.0
  %570 = vmatpush1.msra.mxu0 0.0
  %571 = vmatprep.subr.mxu0 0.0
  %572 = vmatpush1.msra.mxu0 0.0
  %573 = vmatprep.subr.mxu0 0.0
  %574 = vmatpush1.msra.mxu0 0.0
  %575 = vmatprep.subr.mxu0 0.0
  %576 = vmatpush1.msra.mxu0 0.0
  %577 = vmatprep.subr.mxu0 0.0
  %578 = vmatpush1.msra.mxu0 0.0
  %579 = vmatprep.subr.mxu0 0.0
  %580 = vmatpush1.msra.mxu0 0.0
  %581 = vmatprep.subr.mxu0 0.0
  %582 = vmatpush1.msra.mxu0 0.0
  %583 = vmatprep.subr.mxu0 0.0
  %584 = vmatpush1.msra.mxu0 0.0
  %585 = vmatprep.subr.mxu0 0.0
  %586 = vmatpush1.msra.mxu0 0.0
  %587 = vmatprep.subr.mxu0 0.0
  %588 = vmatpush1.msra.mxu0 0.0
  %589 = vmatprep.subr.mxu0 0.0
  %590 = vmatpush1.msra.mxu0 0.0
  %591 = vmatprep.subr.mxu0 0.0
  %592 = vmatpush1.msra.mxu0 0.0
  %593 = vmatprep.mubr.f32.mxu0 0.0
  %594 = vmatmul.mubr.f32.gmra.mrb[0].mxu0 %v527
  %v595 = vpop.f32.mrb[0].mxu0
  %v596 = vadd.f32 0.0, %v595
  %v597 = vpop.f32.mrb[0].mxu0
  %598 = vdwg.mxu0
  %v599 = vadd.f32 %v176, %v596
  %v600 = vxor.u32 %v599, 2147483648
  %v601 = vmul.f32 %v600, 1.442695
  %v602 = vpow.pop %v601
  %v603 = vadd.f32 %v602, 1.0
  %v604 = vrcp.pop %v603
  %v605 = vmul.f32 1.0, %v604
  %v606 = vtanh.pop %v599
  %v607 = vmul.f32 %v605, %v523
  %609 = vrot.lane.b32.xlu0 %v606, 64
  %v610 = vpop.permute.xlu0 %609
  %v612 = vmul.f32 %v605, %v610
  %614 = vrot.lane.b32.xlu0 %v612, 32
  %v615 = vpop.permute.xlu0 %614
  %v617 = vadd.f32 %v607, %v615
  %v618 = vtanh.pop %v617
  %620 = vrot.lane.b32.xlu0 %v618, 64
  %v621 = vpop.permute.xlu0 %620
  %v623 = vmul.f32 %v605, %v621
  %vm624 = vcmp.gt.f32.partialorder %v59, 3.0
  %v625 = vsel %vm624, 1, 0
  %626 = vset.pattern.permute.xlu0 0
  %627 = vperm.xlu0 %626, %v625
  %v628 = vpop.permute.xlu0 %627
  %vm629 = vcmp.eq.s32.totalorder %v628, 1
  %v630 = vsel %vm629, %v623, %v522
  %v631 = vsel %vm629, %v617, %v523
  %633 = vrot.lane.b32.xlu0 %v630, 32
  %v634 = vpop.permute.xlu0 %633
  %v635 = vsel %vm69, %v634, 0
  %637 = vmatprep.subr.mxu0 0.0
  %638 = vmatpush1.msra.mxu0 %v15
  %639 = vmatprep.subr.mxu0 0.0
  %640 = vmatpush1.msra.mxu0 %v16
  %641 = vmatprep.subr.mxu0 0.0
  %642 = vmatpush1.msra.mxu0 %v17
  %643 = vmatprep.subr.mxu0 0.0
  %644 = vmatpush1.msra.mxu0 %v18
  %645 = vmatprep.subr.mxu0 0.0
  %646 = vmatpush1.msra.mxu0 0.0
  %647 = vmatprep.subr.mxu0 0.0
  %648 = vmatpush1.msra.mxu0 0.0
  %649 = vmatprep.subr.mxu0 0.0
  %650 = vmatpush1.msra.mxu0 0.0
  %651 = vmatprep.subr.mxu0 0.0
  %652 = vmatpush1.msra.mxu0 0.0
  %653 = vmatprep.subr.mxu0 0.0
  %654 = vmatpush1.msra.mxu0 0.0
  %655 = vmatprep.subr.mxu0 0.0
  %656 = vmatpush1.msra.mxu0 0.0
  %657 = vmatprep.subr.mxu0 0.0
  %658 = vmatpush1.msra.mxu0 0.0
  %659 = vmatprep.subr.mxu0 0.0
  %660 = vmatpush1.msra.mxu0 0.0
  %661 = vmatprep.subr.mxu0 0.0
  %662 = vmatpush1.msra.mxu0 0.0
  %663 = vmatprep.subr.mxu0 0.0
  %664 = vmatpush1.msra.mxu0 0.0
  %665 = vmatprep.subr.mxu0 0.0
  %666 = vmatpush1.msra.mxu0 0.0
  %667 = vmatprep.subr.mxu0 0.0
  %668 = vmatpush1.msra.mxu0 0.0
  %669 = vmatprep.subr.mxu0 0.0
  %670 = vmatpush1.msra.mxu0 0.0
  %671 = vmatprep.subr.mxu0 0.0
  %672 = vmatpush1.msra.mxu0 0.0
  %673 = vmatprep.subr.mxu0 0.0
  %674 = vmatpush1.msra.mxu0 0.0
  %675 = vmatprep.subr.mxu0 0.0
  %676 = vmatpush1.msra.mxu0 0.0
  %677 = vmatprep.subr.mxu0 0.0
  %678 = vmatpush1.msra.mxu0 0.0
  %679 = vmatprep.subr.mxu0 0.0
  %680 = vmatpush1.msra.mxu0 0.0
  %681 = vmatprep.subr.mxu0 0.0
  %682 = vmatpush1.msra.mxu0 0.0
  %683 = vmatprep.subr.mxu0 0.0
  %684 = vmatpush1.msra.mxu0 0.0
  %685 = vmatprep.subr.mxu0 0.0
  %686 = vmatpush1.msra.mxu0 0.0
  %687 = vmatprep.subr.mxu0 0.0
  %688 = vmatpush1.msra.mxu0 0.0
  %689 = vmatprep.subr.mxu0 0.0
  %690 = vmatpush1.msra.mxu0 0.0
  %691 = vmatprep.subr.mxu0 0.0
  %692 = vmatpush1.msra.mxu0 0.0
  %693 = vmatprep.subr.mxu0 0.0
  %694 = vmatpush1.msra.mxu0 0.0
  %695 = vmatprep.subr.mxu0 0.0
  %696 = vmatpush1.msra.mxu0 0.0
  %697 = vmatprep.subr.mxu0 0.0
  %698 = vmatpush1.msra.mxu0 0.0
  %699 = vmatprep.subr.mxu0 0.0
  %700 = vmatpush1.msra.mxu0 0.0
  %701 = vmatprep.mubr.f32.mxu0 0.0
  %702 = vmatmul.mubr.f32.gmra.mrb[0].mxu0 %v635
  %v703 = vpop.f32.mrb[0].mxu0
  %v704 = vadd.f32 0.0, %v703
  %v705 = vpop.f32.mrb[0].mxu0
  %706 = vdwg.mxu0
  %v707 = vadd.f32 %v181, %v704
  %v708 = vxor.u32 %v707, 2147483648
  %v709 = vmul.f32 %v708, 1.442695
  %v710 = vpow.pop %v709
  %v711 = vadd.f32 %v710, 1.0
  %v712 = vrcp.pop %v711
  %v713 = vmul.f32 1.0, %v712
  %v714 = vtanh.pop %v707
  %v715 = vmul.f32 %v713, %v631
  %717 = vrot.lane.b32.xlu0 %v714, 64
  %v718 = vpop.permute.xlu0 %717
  %v720 = vmul.f32 %v713, %v718
  %722 = vrot.lane.b32.xlu0 %v720, 32
  %v723 = vpop.permute.xlu0 %722
  %v725 = vadd.f32 %v715, %v723
  %v726 = vtanh.pop %v725
  %728 = vrot.lane.b32.xlu0 %v726, 64
  %v729 = vpop.permute.xlu0 %728
  %v731 = vmul.f32 %v713, %v729
  %vm732 = vcmp.gt.f32.partialorder %v59, 4.0
  %v733 = vsel %vm732, 1, 0
  %734 = vset.pattern.permute.xlu0 0
  %735 = vperm.xlu0 %734, %v733
  %v736 = vpop.permute.xlu0 %735
  %vm737 = vcmp.eq.s32.totalorder %v736, 1
  %v738 = vsel %vm737, %v731, %v630
  %v739 = vsel %vm737, %v725, %v631
  %741 = vrot.lane.b32.xlu0 %v738, 32
  %v742 = vpop.permute.xlu0 %741
  %v743 = vsel %vm69, %v742, 0
  %745 = vmatprep.subr.mxu0 0.0
  %746 = vmatpush1.msra.mxu0 %v15
  %747 = vmatprep.subr.mxu0 0.0
  %748 = vmatpush1.msra.mxu0 %v16
  %749 = vmatprep.subr.mxu0 0.0
  %750 = vmatpush1.msra.mxu0 %v17
  %751 = vmatprep.subr.mxu0 0.0
  %752 = vmatpush1.msra.mxu0 %v18
  %753 = vmatprep.subr.mxu0 0.0
  %754 = vmatpush1.msra.mxu0 0.0
  %755 = vmatprep.subr.mxu0 0.0
  %756 = vmatpush1.msra.mxu0 0.0
  %757 = vmatprep.subr.mxu0 0.0
  %758 = vmatpush1.msra.mxu0 0.0
  %759 = vmatprep.subr.mxu0 0.0
  %760 = vmatpush1.msra.mxu0 0.0
  %761 = vmatprep.subr.mxu0 0.0
  %762 = vmatpush1.msra.mxu0 0.0
  %763 = vmatprep.subr.mxu0 0.0
  %764 = vmatpush1.msra.mxu0 0.0
  %765 = vmatprep.subr.mxu0 0.0
  %766 = vmatpush1.msra.mxu0 0.0
  %767 = vmatprep.subr.mxu0 0.0
  %768 = vmatpush1.msra.mxu0 0.0
  %769 = vmatprep.subr.mxu0 0.0
  %770 = vmatpush1.msra.mxu0 0.0
  %771 = vmatprep.subr.mxu0 0.0
  %772 = vmatpush1.msra.mxu0 0.0
  %773 = vmatprep.subr.mxu0 0.0
  %774 = vmatpush1.msra.mxu0 0.0
  %775 = vmatprep.subr.mxu0 0.0
  %776 = vmatpush1.msra.mxu0 0.0
  %777 = vmatprep.subr.mxu0 0.0
  %778 = vmatpush1.msra.mxu0 0.0
  %779 = vmatprep.subr.mxu0 0.0
  %780 = vmatpush1.msra.mxu0 0.0
  %781 = vmatprep.subr.mxu0 0.0
  %782 = vmatpush1.msra.mxu0 0.0
  %783 = vmatprep.subr.mxu0 0.0
  %784 = vmatpush1.msra.mxu0 0.0
  %785 = vmatprep.subr.mxu0 0.0
  %786 = vmatpush1.msra.mxu0 0.0
  %787 = vmatprep.subr.mxu0 0.0
  %788 = vmatpush1.msra.mxu0 0.0
  %789 = vmatprep.subr.mxu0 0.0
  %790 = vmatpush1.msra.mxu0 0.0
  %791 = vmatprep.subr.mxu0 0.0
  %792 = vmatpush1.msra.mxu0 0.0
  %793 = vmatprep.subr.mxu0 0.0
  %794 = vmatpush1.msra.mxu0 0.0
  %795 = vmatprep.subr.mxu0 0.0
  %796 = vmatpush1.msra.mxu0 0.0
  %797 = vmatprep.subr.mxu0 0.0
  %798 = vmatpush1.msra.mxu0 0.0
  %799 = vmatprep.subr.mxu0 0.0
  %800 = vmatpush1.msra.mxu0 0.0
  %801 = vmatprep.subr.mxu0 0.0
  %802 = vmatpush1.msra.mxu0 0.0
  %803 = vmatprep.subr.mxu0 0.0
  %804 = vmatpush1.msra.mxu0 0.0
  %805 = vmatprep.subr.mxu0 0.0
  %806 = vmatpush1.msra.mxu0 0.0
  %807 = vmatprep.subr.mxu0 0.0
  %808 = vmatpush1.msra.mxu0 0.0
  %809 = vmatprep.mubr.f32.mxu0 0.0
  %810 = vmatmul.mubr.f32.gmra.mrb[0].mxu0 %v743
  %v811 = vpop.f32.mrb[0].mxu0
  %v812 = vadd.f32 0.0, %v811
  %v813 = vpop.f32.mrb[0].mxu0
  %814 = vdwg.mxu0
  %v815 = vadd.f32 %v186, %v812
  %v816 = vxor.u32 %v815, 2147483648
  %v817 = vmul.f32 %v816, 1.442695
  %v818 = vpow.pop %v817
  %v819 = vadd.f32 %v818, 1.0
  %v820 = vrcp.pop %v819
  %v821 = vmul.f32 1.0, %v820
  %v822 = vtanh.pop %v815
  %v823 = vmul.f32 %v821, %v739
  %825 = vrot.lane.b32.xlu0 %v822, 64
  %v826 = vpop.permute.xlu0 %825
  %v828 = vmul.f32 %v821, %v826
  %830 = vrot.lane.b32.xlu0 %v828, 32
  %v831 = vpop.permute.xlu0 %830
  %v833 = vadd.f32 %v823, %v831
  %v834 = vtanh.pop %v833
  %836 = vrot.lane.b32.xlu0 %v834, 64
  %v837 = vpop.permute.xlu0 %836
  %v839 = vmul.f32 %v821, %v837
  %vm840 = vcmp.gt.f32.partialorder %v59, 5.0
  %v841 = vsel %vm840, 1, 0
  %842 = vset.pattern.permute.xlu0 0
  %843 = vperm.xlu0 %842, %v841
  %v844 = vpop.permute.xlu0 %843
  %vm845 = vcmp.eq.s32.totalorder %v844, 1
  %v846 = vsel %vm845, %v839, %v738
  %v847 = vsel %vm845, %v833, %v739
  %849 = vrot.lane.b32.xlu0 %v846, 32
  %v850 = vpop.permute.xlu0 %849
  %v851 = vsel %vm69, %v850, 0
  %853 = vmatprep.subr.mxu0 0.0
  %854 = vmatpush1.msra.mxu0 %v15
  %855 = vmatprep.subr.mxu0 0.0
  %856 = vmatpush1.msra.mxu0 %v16
  %857 = vmatprep.subr.mxu0 0.0
  %858 = vmatpush1.msra.mxu0 %v17
  %859 = vmatprep.subr.mxu0 0.0
  %860 = vmatpush1.msra.mxu0 %v18
  %861 = vmatprep.subr.mxu0 0.0
  %862 = vmatpush1.msra.mxu0 0.0
  %863 = vmatprep.subr.mxu0 0.0
  %864 = vmatpush1.msra.mxu0 0.0
  %865 = vmatprep.subr.mxu0 0.0
  %866 = vmatpush1.msra.mxu0 0.0
  %867 = vmatprep.subr.mxu0 0.0
  %868 = vmatpush1.msra.mxu0 0.0
  %869 = vmatprep.subr.mxu0 0.0
  %870 = vmatpush1.msra.mxu0 0.0
  %871 = vmatprep.subr.mxu0 0.0
  %872 = vmatpush1.msra.mxu0 0.0
  %873 = vmatprep.subr.mxu0 0.0
  %874 = vmatpush1.msra.mxu0 0.0
  %875 = vmatprep.subr.mxu0 0.0
  %876 = vmatpush1.msra.mxu0 0.0
  %877 = vmatprep.subr.mxu0 0.0
  %878 = vmatpush1.msra.mxu0 0.0
  %879 = vmatprep.subr.mxu0 0.0
  %880 = vmatpush1.msra.mxu0 0.0
  %881 = vmatprep.subr.mxu0 0.0
  %882 = vmatpush1.msra.mxu0 0.0
  %883 = vmatprep.subr.mxu0 0.0
  %884 = vmatpush1.msra.mxu0 0.0
  %885 = vmatprep.subr.mxu0 0.0
  %886 = vmatpush1.msra.mxu0 0.0
  %887 = vmatprep.subr.mxu0 0.0
  %888 = vmatpush1.msra.mxu0 0.0
  %889 = vmatprep.subr.mxu0 0.0
  %890 = vmatpush1.msra.mxu0 0.0
  %891 = vmatprep.subr.mxu0 0.0
  %892 = vmatpush1.msra.mxu0 0.0
  %893 = vmatprep.subr.mxu0 0.0
  %894 = vmatpush1.msra.mxu0 0.0
  %895 = vmatprep.subr.mxu0 0.0
  %896 = vmatpush1.msra.mxu0 0.0
  %897 = vmatprep.subr.mxu0 0.0
  %898 = vmatpush1.msra.mxu0 0.0
  %899 = vmatprep.subr.mxu0 0.0
  %900 = vmatpush1.msra.mxu0 0.0
  %901 = vmatprep.subr.mxu0 0.0
  %902 = vmatpush1.msra.mxu0 0.0
  %903 = vmatprep.subr.mxu0 0.0
  %904 = vmatpush1.msra.mxu0 0.0
  %905 = vmatprep.subr.mxu0 0.0
  %906 = vmatpush1.msra.mxu0 0.0
  %907 = vmatprep.subr.mxu0 0.0
  %908 = vmatpush1.msra.mxu0 0.0
  %909 = vmatprep.subr.mxu0 0.0
  %910 = vmatpush1.msra.mxu0 0.0
  %911 = vmatprep.subr.mxu0 0.0
  %912 = vmatpush1.msra.mxu0 0.0
  %913 = vmatprep.subr.mxu0 0.0
  %914 = vmatpush1.msra.mxu0 0.0
  %915 = vmatprep.subr.mxu0 0.0
  %916 = vmatpush1.msra.mxu0 0.0
  %917 = vmatprep.mubr.f32.mxu0 0.0
  %918 = vmatmul.mubr.f32.gmra.mrb[0].mxu0 %v851
  %v919 = vpop.f32.mrb[0].mxu0
  %v920 = vadd.f32 0.0, %v919
  %v921 = vpop.f32.mrb[0].mxu0
  %922 = vdwg.mxu0
  %v923 = vadd.f32 %v191, %v920
  %v924 = vxor.u32 %v923, 2147483648
  %v925 = vmul.f32 %v924, 1.442695
  %v926 = vpow.pop %v925
  %v927 = vadd.f32 %v926, 1.0
  %v928 = vrcp.pop %v927
  %v929 = vmul.f32 1.0, %v928
  %v930 = vtanh.pop %v923
  %v931 = vmul.f32 %v929, %v847
  %933 = vrot.lane.b32.xlu0 %v930, 64
  %v934 = vpop.permute.xlu0 %933
  %v936 = vmul.f32 %v929, %v934
  %938 = vrot.lane.b32.xlu0 %v936, 32
  %v939 = vpop.permute.xlu0 %938
  %v941 = vadd.f32 %v931, %v939
  %v942 = vtanh.pop %v941
  %944 = vrot.lane.b32.xlu0 %v942, 64
  %v945 = vpop.permute.xlu0 %944
  %v947 = vmul.f32 %v929, %v945
  %vm948 = vcmp.gt.f32.partialorder %v59, 6.0
  %v949 = vsel %vm948, 1, 0
  %950 = vset.pattern.permute.xlu0 0
  %951 = vperm.xlu0 %950, %v949
  %v952 = vpop.permute.xlu0 %951
  %vm953 = vcmp.eq.s32.totalorder %v952, 1
  %v954 = vsel %vm953, %v947, %v846
  %v955 = vsel %vm953, %v941, %v847
  %957 = vrot.lane.b32.xlu0 %v954, 32
  %v958 = vpop.permute.xlu0 %957
  %v959 = vsel %vm69, %v958, 0
  %961 = vmatprep.subr.mxu0 0.0
  %962 = vmatpush1.msra.mxu0 %v15
  %963 = vmatprep.subr.mxu0 0.0
  %964 = vmatpush1.msra.mxu0 %v16
  %965 = vmatprep.subr.mxu0 0.0
  %966 = vmatpush1.msra.mxu0 %v17
  %967 = vmatprep.subr.mxu0 0.0
  %968 = vmatpush1.msra.mxu0 %v18
  %969 = vmatprep.subr.mxu0 0.0
  %970 = vmatpush1.msra.mxu0 0.0
  %971 = vmatprep.subr.mxu0 0.0
  %972 = vmatpush1.msra.mxu0 0.0
  %973 = vmatprep.subr.mxu0 0.0
  %974 = vmatpush1.msra.mxu0 0.0
  %975 = vmatprep.subr.mxu0 0.0
  %976 = vmatpush1.msra.mxu0 0.0
  %977 = vmatprep.subr.mxu0 0.0
  %978 = vmatpush1.msra.mxu0 0.0
  %979 = vmatprep.subr.mxu0 0.0
  %980 = vmatpush1.msra.mxu0 0.0
  %981 = vmatprep.subr.mxu0 0.0
  %982 = vmatpush1.msra.mxu0 0.0
  %983 = vmatprep.subr.mxu0 0.0
  %984 = vmatpush1.msra.mxu0 0.0
  %985 = vmatprep.subr.mxu0 0.0
  %986 = vmatpush1.msra.mxu0 0.0
  %987 = vmatprep.subr.mxu0 0.0
  %988 = vmatpush1.msra.mxu0 0.0
  %989 = vmatprep.subr.mxu0 0.0
  %990 = vmatpush1.msra.mxu0 0.0
  %991 = vmatprep.subr.mxu0 0.0
  %992 = vmatpush1.msra.mxu0 0.0
  %993 = vmatprep.subr.mxu0 0.0
  %994 = vmatpush1.msra.mxu0 0.0
  %995 = vmatprep.subr.mxu0 0.0
  %996 = vmatpush1.msra.mxu0 0.0
  %997 = vmatprep.subr.mxu0 0.0
  %998 = vmatpush1.msra.mxu0 0.0
  %999 = vmatprep.subr.mxu0 0.0
  %1000 = vmatpush1.msra.mxu0 0.0
  %1001 = vmatprep.subr.mxu0 0.0
  %1002 = vmatpush1.msra.mxu0 0.0
  %1003 = vmatprep.subr.mxu0 0.0
  %1004 = vmatpush1.msra.mxu0 0.0
  %1005 = vmatprep.subr.mxu0 0.0
  %1006 = vmatpush1.msra.mxu0 0.0
  %1007 = vmatprep.subr.mxu0 0.0
  %1008 = vmatpush1.msra.mxu0 0.0
  %1009 = vmatprep.subr.mxu0 0.0
  %1010 = vmatpush1.msra.mxu0 0.0
  %1011 = vmatprep.subr.mxu0 0.0
  %1012 = vmatpush1.msra.mxu0 0.0
  %1013 = vmatprep.subr.mxu0 0.0
  %1014 = vmatpush1.msra.mxu0 0.0
  %1015 = vmatprep.subr.mxu0 0.0
  %1016 = vmatpush1.msra.mxu0 0.0
  %1017 = vmatprep.subr.mxu0 0.0
  %1018 = vmatpush1.msra.mxu0 0.0
  %1019 = vmatprep.subr.mxu0 0.0
  %1020 = vmatpush1.msra.mxu0 0.0
  %1021 = vmatprep.subr.mxu0 0.0
  %1022 = vmatpush1.msra.mxu0 0.0
  %1023 = vmatprep.subr.mxu0 0.0
  %1024 = vmatpush1.msra.mxu0 0.0
  %1025 = vmatprep.mubr.f32.mxu0 0.0
  %1026 = vmatmul.mubr.f32.gmra.mrb[0].mxu0 %v959
  %v1027 = vpop.f32.mrb[0].mxu0
  %v1028 = vadd.f32 0.0, %v1027
  %v1029 = vpop.f32.mrb[0].mxu0
  %1030 = vdwg.mxu0
  %v1031 = vadd.f32 %v196, %v1028
  %v1032 = vxor.u32 %v1031, 2147483648
  %v1033 = vmul.f32 %v1032, 1.442695
  %v1034 = vpow.pop %v1033
  %v1035 = vadd.f32 %v1034, 1.0
  %v1036 = vrcp.pop %v1035
  %v1037 = vmul.f32 1.0, %v1036
  %v1038 = vtanh.pop %v1031
  %v1039 = vmul.f32 %v1037, %v955
  %1041 = vrot.lane.b32.xlu0 %v1038, 64
  %v1042 = vpop.permute.xlu0 %1041
  %v1044 = vmul.f32 %v1037, %v1042
  %1046 = vrot.lane.b32.xlu0 %v1044, 32
  %v1047 = vpop.permute.xlu0 %1046
  %v1049 = vadd.f32 %v1039, %v1047
  %v1050 = vtanh.pop %v1049
  %1052 = vrot.lane.b32.xlu0 %v1050, 64
  %v1053 = vpop.permute.xlu0 %1052
  %v1055 = vmul.f32 %v1037, %v1053
  %vm1056 = vcmp.gt.f32.partialorder %v59, 7.0
  %v1057 = vsel %vm1056, 1, 0
  %1058 = vset.pattern.permute.xlu0 0
  %1059 = vperm.xlu0 %1058, %v1057
  %v1060 = vpop.permute.xlu0 %1059
  %vm1061 = vcmp.eq.s32.totalorder %v1060, 1
  %v1062 = vsel %vm1061, %v1055, %v954
  %vm1063 = vcmask 523264
  %v1065 = vsel %vm1063, %v54, 0
  %v1068 = vsel %vm1063, %v55, 0
  %v1071 = vsel %vm1063, %v56, 0
  %v1074 = vsel %vm1063, %v57, 0
  %v1077 = vsel %vm1063, %v58, 0
  %1079 = vmatprep.subr.mxu0 0.0
  %1080 = vmatpush1.msra.mxu0 %v19
  %1081 = vmatprep.subr.mxu0 0.0
  %1082 = vmatpush1.msra.mxu0 %v20
  %1083 = vmatprep.subr.mxu0 0.0
  %1084 = vmatpush1.msra.mxu0 %v21
  %1085 = vmatprep.subr.mxu0 0.0
  %1086 = vmatpush1.msra.mxu0 %v22
  %1087 = vmatprep.subr.mxu0 0.0
  %1088 = vmatpush1.msra.mxu0 %v23
  %1089 = vmatprep.subr.mxu0 0.0
  %1090 = vmatpush1.msra.mxu0 %v24
  %1091 = vmatprep.subr.mxu0 0.0
  %1092 = vmatpush1.msra.mxu0 %v25
  %1093 = vmatprep.subr.mxu0 0.0
  %1094 = vmatpush1.msra.mxu0 %v26
  %1095 = vmatprep.subr.mxu0 0.0
  %1096 = vmatpush1.msra.mxu0 0.0
  %1097 = vmatprep.subr.mxu0 0.0
  %1098 = vmatpush1.msra.mxu0 0.0
  %1099 = vmatprep.subr.mxu0 0.0
  %1100 = vmatpush1.msra.mxu0 0.0
  %1101 = vmatprep.subr.mxu0 0.0
  %1102 = vmatpush1.msra.mxu0 0.0
  %1103 = vmatprep.subr.mxu0 0.0
  %1104 = vmatpush1.msra.mxu0 0.0
  %1105 = vmatprep.subr.mxu0 0.0
  %1106 = vmatpush1.msra.mxu0 0.0
  %1107 = vmatprep.subr.mxu0 0.0
  %1108 = vmatpush1.msra.mxu0 0.0
  %1109 = vmatprep.subr.mxu0 0.0
  %1110 = vmatpush1.msra.mxu0 0.0
  %1111 = vmatprep.subr.mxu0 0.0
  %1112 = vmatpush1.msra.mxu0 0.0
  %1113 = vmatprep.subr.mxu0 0.0
  %1114 = vmatpush1.msra.mxu0 0.0
  %1115 = vmatprep.subr.mxu0 0.0
  %1116 = vmatpush1.msra.mxu0 0.0
  %1117 = vmatprep.subr.mxu0 0.0
  %1118 = vmatpush1.msra.mxu0 0.0
  %1119 = vmatprep.subr.mxu0 0.0
  %1120 = vmatpush1.msra.mxu0 0.0
  %1121 = vmatprep.subr.mxu0 0.0
  %1122 = vmatpush1.msra.mxu0 0.0
  %1123 = vmatprep.subr.mxu0 0.0
  %1124 = vmatpush1.msra.mxu0 0.0
  %1125 = vmatprep.subr.mxu0 0.0
  %1126 = vmatpush1.msra.mxu0 0.0
  %1127 = vmatprep.subr.mxu0 0.0
  %1128 = vmatpush1.msra.mxu0 0.0
  %1129 = vmatprep.subr.mxu0 0.0
  %1130 = vmatpush1.msra.mxu0 0.0
  %1131 = vmatprep.subr.mxu0 0.0
  %1132 = vmatpush1.msra.mxu0 0.0
  %1133 = vmatprep.subr.mxu0 0.0
  %1134 = vmatpush1.msra.mxu0 0.0
  %1135 = vmatprep.subr.mxu0 0.0
  %1136 = vmatpush1.msra.mxu0 0.0
  %1137 = vmatprep.subr.mxu0 0.0
  %1138 = vmatpush1.msra.mxu0 0.0
  %1139 = vmatprep.subr.mxu0 0.0
  %1140 = vmatpush1.msra.mxu0 0.0
  %1141 = vmatprep.subr.mxu0 0.0
  %1142 = vmatpush1.msra.mxu0 0.0
  %1143 = vmatprep.mubr.f32.mxu0 0.0
  %1144 = vmatmul.mubr.f32.gmra.mrb[0].mxu0 %v1065
  %v1145 = vpop.f32.mrb[0].mxu0
  %v1146 = vadd.f32 0.0, %v1145
  %v1147 = vpop.f32.mrb[0].mxu0
  %1148 = vmatprep.mubr.f32.mxu0 0.0
  %1149 = vmatmul.mubr.f32.gmra.mrb[0].mxu0 %v1068
  %v1150 = vpop.f32.mrb[0].mxu0
  %v1151 = vadd.f32 0.0, %v1150
  %v1152 = vpop.f32.mrb[0].mxu0
  %1153 = vmatprep.mubr.f32.mxu0 0.0
  %1154 = vmatmul.mubr.f32.gmra.mrb[0].mxu0 %v1071
  %v1155 = vpop.f32.mrb[0].mxu0
  %v1156 = vadd.f32 0.0, %v1155
  %v1157 = vpop.f32.mrb[0].mxu0
  %1158 = vmatprep.mubr.f32.mxu0 0.0
  %1159 = vmatmul.mubr.f32.gmra.mrb[0].mxu0 %v1074
  %v1160 = vpop.f32.mrb[0].mxu0
  %v1161 = vadd.f32 0.0, %v1160
  %v1162 = vpop.f32.mrb[0].mxu0
  %1163 = vmatprep.mubr.f32.mxu0 0.0
  %1164 = vmatmul.mubr.f32.gmra.mrb[0].mxu0 %v1077
  %v1165 = vpop.f32.mrb[0].mxu0
  %v1166 = vadd.f32 0.0, %v1165
  %v1167 = vpop.f32.mrb[0].mxu0
  %1168 = vdwg.mxu0
  %v1169 = vlaneseq
  %v1170 = vshrl.u32 %v1169, 7
  %v1171 = vsub.s32 0, %v1170
  %v1172 = vrot.slane %v40, %v1171
  %1174 = vrot.lane.b32.xlu0 %v1062, 32
  %v1175 = vpop.permute.xlu0 %1174
  %v1176 = vsel %vm69, %v1175, 0
  %1178 = vmatprep.subr.mxu0 0.0
  %1179 = vmatpush1.msra.mxu0 %v27
  %1180 = vmatprep.subr.mxu0 0.0
  %1181 = vmatpush1.msra.mxu0 %v28
  %1182 = vmatprep.subr.mxu0 0.0
  %1183 = vmatpush1.msra.mxu0 %v29
  %1184 = vmatprep.subr.mxu0 0.0
  %1185 = vmatpush1.msra.mxu0 %v30
  %1186 = vmatprep.subr.mxu0 0.0
  %1187 = vmatpush1.msra.mxu0 0.0
  %1188 = vmatprep.subr.mxu0 0.0
  %1189 = vmatpush1.msra.mxu0 0.0
  %1190 = vmatprep.subr.mxu0 0.0
  %1191 = vmatpush1.msra.mxu0 0.0
  %1192 = vmatprep.subr.mxu0 0.0
  %1193 = vmatpush1.msra.mxu0 0.0
  %1194 = vmatprep.subr.mxu0 0.0
  %1195 = vmatpush1.msra.mxu0 0.0
  %1196 = vmatprep.subr.mxu0 0.0
  %1197 = vmatpush1.msra.mxu0 0.0
  %1198 = vmatprep.subr.mxu0 0.0
  %1199 = vmatpush1.msra.mxu0 0.0
  %1200 = vmatprep.subr.mxu0 0.0
  %1201 = vmatpush1.msra.mxu0 0.0
  %1202 = vmatprep.subr.mxu0 0.0
  %1203 = vmatpush1.msra.mxu0 0.0
  %1204 = vmatprep.subr.mxu0 0.0
  %1205 = vmatpush1.msra.mxu0 0.0
  %1206 = vmatprep.subr.mxu0 0.0
  %1207 = vmatpush1.msra.mxu0 0.0
  %1208 = vmatprep.subr.mxu0 0.0
  %1209 = vmatpush1.msra.mxu0 0.0
  %1210 = vmatprep.subr.mxu0 0.0
  %1211 = vmatpush1.msra.mxu0 0.0
  %1212 = vmatprep.subr.mxu0 0.0
  %1213 = vmatpush1.msra.mxu0 0.0
  %1214 = vmatprep.subr.mxu0 0.0
  %1215 = vmatpush1.msra.mxu0 0.0
  %1216 = vmatprep.subr.mxu0 0.0
  %1217 = vmatpush1.msra.mxu0 0.0
  %1218 = vmatprep.subr.mxu0 0.0
  %1219 = vmatpush1.msra.mxu0 0.0
  %1220 = vmatprep.subr.mxu0 0.0
  %1221 = vmatpush1.msra.mxu0 0.0
  %1222 = vmatprep.subr.mxu0 0.0
  %1223 = vmatpush1.msra.mxu0 0.0
  %1224 = vmatprep.subr.mxu0 0.0
  %1225 = vmatpush1.msra.mxu0 0.0
  %1226 = vmatprep.subr.mxu0 0.0
  %1227 = vmatpush1.msra.mxu0 0.0
  %1228 = vmatprep.subr.mxu0 0.0
  %1229 = vmatpush1.msra.mxu0 0.0
  %1230 = vmatprep.subr.mxu0 0.0
  %1231 = vmatpush1.msra.mxu0 0.0
  %1232 = vmatprep.subr.mxu0 0.0
  %1233 = vmatpush1.msra.mxu0 0.0
  %1234 = vmatprep.subr.mxu0 0.0
  %1235 = vmatpush1.msra.mxu0 0.0
  %1236 = vmatprep.subr.mxu0 0.0
  %1237 = vmatpush1.msra.mxu0 0.0
  %1238 = vmatprep.subr.mxu0 0.0
  %1239 = vmatpush1.msra.mxu0 0.0
  %1240 = vmatprep.subr.mxu0 0.0
  %1241 = vmatpush1.msra.mxu0 0.0
  %1242 = vmatprep.mubr.f32.mxu0 0.0
  %1243 = vmatmul.mubr.f32.gmra.mrb[0].mxu0 %v1176
  %v1244 = vpop.f32.mrb[0].mxu0
  %v1245 = vadd.f32 %v1172, %v1244
  %v1246 = vpop.f32.mrb[0].mxu0
  %1247 = vdwg.mxu0
  %vm1248 = vcmask 785920
  %v1249 = vsel %vm1248, %v45, 0.0
  %v1250 = vrot.slane %v1249, 4
  %v1251 = vadd.f32 %v1249, %v1250
  %v1252 = vrot.slane %v1251, 2
  %v1253 = vadd.f32 %v1251, %v1252
  %v1254 = vrot.slane %v1253, 1
  %v1255 = vadd.f32 %v1253, %v1254
  %v1256 = vmul.f32 %v1255, 0.5
  %v1257 = vsub.f32 %v45, %v1256
  %v1258 = vmul.f32 %v1257, %v1257
  %v1259 = vmul.f32 %v1258, %v64
  %v1260 = vsel %vm1248, %v1259, 0.0
  %v1261 = vrot.slane %v1260, 4
  %v1262 = vadd.f32 %v1260, %v1261
  %v1263 = vrot.slane %v1262, 2
  %v1264 = vadd.f32 %v1262, %v1263
  %v1265 = vrot.slane %v1264, 1
  %v1266 = vadd.f32 %v1264, %v1265
  %v1267 = vmul.f32 %v1266, 0.5
  %v1268 = vadd.f32 %v1267, 1e-05
  %v1269 = vrsqrt.pop %v1268
  %v1270 = vmul.f32 %v1257, %v1269
  %v1271 = vlaneseq
  %v1272 = vshrl.u32 %v1271, 7
  %v1273 = vsub.s32 0, %v1272
  %v1274 = vrot.slane %v43, %v1273
  %1276 = vrot.lane.b32.xlu0 %v1274, 64
  %v1277 = vpop.permute.xlu0 %1276
  %v1279 = vmul.f32 %v1270, %v1277
  %v1280 = vlaneseq
  %v1281 = vshrl.u32 %v1280, 7
  %v1282 = vsub.s32 0, %v1281
  %v1283 = vrot.slane %v44, %v1282
  %1285 = vrot.lane.b32.xlu0 %v1283, 64
  %v1286 = vpop.permute.xlu0 %1285
  %v1288 = vadd.f32 %v1279, %v1286
  %v1289 = vadd.f32 %v1146, %v1245
  %v1290 = vlaneseq
  %v1291 = vshrl.u32 %v1290, 7
  %v1292 = vsub.s32 0, %v1291
  %v1293 = vrot.slane %v41, %v1292
  %1295 = vrot.lane.b32.xlu0 %v1288, 64
  %v1296 = vpop.permute.xlu0 %1295
  %v1297 = vsel %vm69, %v1296, 0
  %1299 = vmatprep.subr.mxu0 0.0
  %1300 = vmatpush1.msra.mxu0 %v31
  %1301 = vmatprep.subr.mxu0 0.0
  %1302 = vmatpush1.msra.mxu0 %v32
  %1303 = vmatprep.subr.mxu0 0.0
  %1304 = vmatpush1.msra.mxu0 %v33
  %1305 = vmatprep.subr.mxu0 0.0
  %1306 = vmatpush1.msra.mxu0 %v34
  %1307 = vmatprep.subr.mxu0 0.0
  %1308 = vmatpush1.msra.mxu0 0.0
  %1309 = vmatprep.subr.mxu0 0.0
  %1310 = vmatpush1.msra.mxu0 0.0
  %1311 = vmatprep.subr.mxu0 0.0
  %1312 = vmatpush1.msra.mxu0 0.0
  %1313 = vmatprep.subr.mxu0 0.0
  %1314 = vmatpush1.msra.mxu0 0.0
  %1315 = vmatprep.subr.mxu0 0.0
  %1316 = vmatpush1.msra.mxu0 0.0
  %1317 = vmatprep.subr.mxu0 0.0
  %1318 = vmatpush1.msra.mxu0 0.0
  %1319 = vmatprep.subr.mxu0 0.0
  %1320 = vmatpush1.msra.mxu0 0.0
  %1321 = vmatprep.subr.mxu0 0.0
  %1322 = vmatpush1.msra.mxu0 0.0
  %1323 = vmatprep.subr.mxu0 0.0
  %1324 = vmatpush1.msra.mxu0 0.0
  %1325 = vmatprep.subr.mxu0 0.0
  %1326 = vmatpush1.msra.mxu0 0.0
  %1327 = vmatprep.subr.mxu0 0.0
  %1328 = vmatpush1.msra.mxu0 0.0
  %1329 = vmatprep.subr.mxu0 0.0
  %1330 = vmatpush1.msra.mxu0 0.0
  %1331 = vmatprep.subr.mxu0 0.0
  %1332 = vmatpush1.msra.mxu0 0.0
  %1333 = vmatprep.subr.mxu0 0.0
  %1334 = vmatpush1.msra.mxu0 0.0
  %1335 = vmatprep.subr.mxu0 0.0
  %1336 = vmatpush1.msra.mxu0 0.0
  %1337 = vmatprep.subr.mxu0 0.0
  %1338 = vmatpush1.msra.mxu0 0.0
  %1339 = vmatprep.subr.mxu0 0.0
  %1340 = vmatpush1.msra.mxu0 0.0
  %1341 = vmatprep.subr.mxu0 0.0
  %1342 = vmatpush1.msra.mxu0 0.0
  %1343 = vmatprep.subr.mxu0 0.0
  %1344 = vmatpush1.msra.mxu0 0.0
  %1345 = vmatprep.subr.mxu0 0.0
  %1346 = vmatpush1.msra.mxu0 0.0
  %1347 = vmatprep.subr.mxu0 0.0
  %1348 = vmatpush1.msra.mxu0 0.0
  %1349 = vmatprep.subr.mxu0 0.0
  %1350 = vmatpush1.msra.mxu0 0.0
  %1351 = vmatprep.subr.mxu0 0.0
  %1352 = vmatpush1.msra.mxu0 0.0
  %1353 = vmatprep.subr.mxu0 0.0
  %1354 = vmatpush1.msra.mxu0 0.0
  %1355 = vmatprep.subr.mxu0 0.0
  %1356 = vmatpush1.msra.mxu0 0.0
  %1357 = vmatprep.subr.mxu0 0.0
  %1358 = vmatpush1.msra.mxu0 0.0
  %1359 = vmatprep.subr.mxu0 0.0
  %1360 = vmatpush1.msra.mxu0 0.0
  %1361 = vmatprep.subr.mxu0 0.0
  %1362 = vmatpush1.msra.mxu0 0.0
  %1363 = vmatprep.mubr.f32.mxu0 0.0
  %1364 = vmatmul.mubr.f32.gmra.mrb[0].mxu0 %v1297
  %v1365 = vpop.f32.mrb[0].mxu0
  %v1366 = vadd.f32 %v1293, %v1365
  %v1367 = vpop.f32.mrb[0].mxu0
  %1368 = vdwg.mxu0
  %v1369 = vadd.f32 %v1289, %v1366
  %v1370 = vxor.u32 %v1369, 2147483648
  %v1371 = vmul.f32 %v1370, 1.442695
  %v1372 = vpow.pop %v1371
  %v1373 = vadd.f32 %v1372, 1.0
  %v1374 = vrcp.pop %v1373
  %v1375 = vmul.f32 1.0, %v1374
  %1377 = vrot.lane.b32.xlu0 %v1366, 64
  %v1378 = vpop.permute.xlu0 %1377
  %v1380 = vmul.f32 %v1375, %v1378
  %1382 = vrot.lane.b32.xlu0 %v1380, 64
  %v1383 = vpop.permute.xlu0 %1382
  %v1385 = vadd.f32 %v1289, %v1383
  %v1386 = vtanh.pop %v1385
  %v1387 = vsub.f32 1.0, %v1375
  %1389 = vrot.lane.b32.xlu0 %v1386, 96
  %v1390 = vpop.permute.xlu0 %1389
  %v1392 = vmul.f32 %v1387, %v1390
  %1393 = vrot.lane.b32.xlu0 %v1288, 96
  %v1394 = vpop.permute.xlu0 %1393
  %v1396 = vmul.f32 %v1375, %v1394
  %v1397 = vadd.f32 %v1392, %v1396
  %v1398 = vmul.f32 %v1397, %v64
  %vm1399 = vcmask 523520
  %v1400 = vsel %vm1399, %v1398, 0.0
  %v1401 = vrot.slane %v1400, 4
  %v1402 = vadd.f32 %v1400, %v1401
  %v1403 = vrot.slane %v1402, 2
  %v1404 = vadd.f32 %v1402, %v1403
  %v1405 = vrot.slane %v1404, 1
  %v1406 = vadd.f32 %v1404, %v1405
  %v1407 = vmul.f32 %v1406, 0.5
  %v1408 = vsub.f32 %v1398, %v1407
  %v1409 = vmul.f32 %v1408, %v1408
  %v1410 = vmul.f32 %v1409, %v64
  %v1411 = vsel %vm1399, %v1410, 0.0
  %v1412 = vrot.slane %v1411, 4
  %v1413 = vadd.f32 %v1411, %v1412
  %v1414 = vrot.slane %v1413, 2
  %v1415 = vadd.f32 %v1413, %v1414
  %v1416 = vrot.slane %v1415, 1
  %v1417 = vadd.f32 %v1415, %v1416
  %v1418 = vmul.f32 %v1417, 0.5
  %v1419 = vadd.f32 %v1418, 1e-05
  %v1420 = vrsqrt.pop %v1419
  %v1421 = vmul.f32 %v1408, %v1420
  %1422 = vrot.lane.b32.xlu0 %v1274, 32
  %v1423 = vpop.permute.xlu0 %1422
  %v1425 = vmul.f32 %v1421, %v1423
  %1426 = vrot.lane.b32.xlu0 %v1283, 32
  %v1427 = vpop.permute.xlu0 %1426
  %v1429 = vadd.f32 %v1425, %v1427
  %v1430 = vadd.f32 %v1151, %v1245
  %1432 = vrot.lane.b32.xlu0 %v1429, 96
  %v1433 = vpop.permute.xlu0 %1432
  %v1434 = vsel %vm69, %v1433, 0
  %1436 = vmatprep.subr.mxu0 0.0
  %1437 = vmatpush1.msra.mxu0 %v31
  %1438 = vmatprep.subr.mxu0 0.0
  %1439 = vmatpush1.msra.mxu0 %v32
  %1440 = vmatprep.subr.mxu0 0.0
  %1441 = vmatpush1.msra.mxu0 %v33
  %1442 = vmatprep.subr.mxu0 0.0
  %1443 = vmatpush1.msra.mxu0 %v34
  %1444 = vmatprep.subr.mxu0 0.0
  %1445 = vmatpush1.msra.mxu0 0.0
  %1446 = vmatprep.subr.mxu0 0.0
  %1447 = vmatpush1.msra.mxu0 0.0
  %1448 = vmatprep.subr.mxu0 0.0
  %1449 = vmatpush1.msra.mxu0 0.0
  %1450 = vmatprep.subr.mxu0 0.0
  %1451 = vmatpush1.msra.mxu0 0.0
  %1452 = vmatprep.subr.mxu0 0.0
  %1453 = vmatpush1.msra.mxu0 0.0
  %1454 = vmatprep.subr.mxu0 0.0
  %1455 = vmatpush1.msra.mxu0 0.0
  %1456 = vmatprep.subr.mxu0 0.0
  %1457 = vmatpush1.msra.mxu0 0.0
  %1458 = vmatprep.subr.mxu0 0.0
  %1459 = vmatpush1.msra.mxu0 0.0
  %1460 = vmatprep.subr.mxu0 0.0
  %1461 = vmatpush1.msra.mxu0 0.0
  %1462 = vmatprep.subr.mxu0 0.0
  %1463 = vmatpush1.msra.mxu0 0.0
  %1464 = vmatprep.subr.mxu0 0.0
  %1465 = vmatpush1.msra.mxu0 0.0
  %1466 = vmatprep.subr.mxu0 0.0
  %1467 = vmatpush1.msra.mxu0 0.0
  %1468 = vmatprep.subr.mxu0 0.0
  %1469 = vmatpush1.msra.mxu0 0.0
  %1470 = vmatprep.subr.mxu0 0.0
  %1471 = vmatpush1.msra.mxu0 0.0
  %1472 = vmatprep.subr.mxu0 0.0
  %1473 = vmatpush1.msra.mxu0 0.0
  %1474 = vmatprep.subr.mxu0 0.0
  %1475 = vmatpush1.msra.mxu0 0.0
  %1476 = vmatprep.subr.mxu0 0.0
  %1477 = vmatpush1.msra.mxu0 0.0
  %1478 = vmatprep.subr.mxu0 0.0
  %1479 = vmatpush1.msra.mxu0 0.0
  %1480 = vmatprep.subr.mxu0 0.0
  %1481 = vmatpush1.msra.mxu0 0.0
  %1482 = vmatprep.subr.mxu0 0.0
  %1483 = vmatpush1.msra.mxu0 0.0
  %1484 = vmatprep.subr.mxu0 0.0
  %1485 = vmatpush1.msra.mxu0 0.0
  %1486 = vmatprep.subr.mxu0 0.0
  %1487 = vmatpush1.msra.mxu0 0.0
  %1488 = vmatprep.subr.mxu0 0.0
  %1489 = vmatpush1.msra.mxu0 0.0
  %1490 = vmatprep.subr.mxu0 0.0
  %1491 = vmatpush1.msra.mxu0 0.0
  %1492 = vmatprep.subr.mxu0 0.0
  %1493 = vmatpush1.msra.mxu0 0.0
  %1494 = vmatprep.subr.mxu0 0.0
  %1495 = vmatpush1.msra.mxu0 0.0
  %1496 = vmatprep.subr.mxu0 0.0
  %1497 = vmatpush1.msra.mxu0 0.0
  %1498 = vmatprep.subr.mxu0 0.0
  %1499 = vmatpush1.msra.mxu0 0.0
  %1500 = vmatprep.mubr.f32.mxu0 0.0
  %1501 = vmatmul.mubr.f32.gmra.mrb[0].mxu0 %v1434
  %v1502 = vpop.f32.mrb[0].mxu0
  %v1503 = vadd.f32 %v1293, %v1502
  %v1504 = vpop.f32.mrb[0].mxu0
  %1505 = vdwg.mxu0
  %v1506 = vadd.f32 %v1430, %v1503
  %v1507 = vxor.u32 %v1506, 2147483648
  %v1508 = vmul.f32 %v1507, 1.442695
  %v1509 = vpow.pop %v1508
  %v1510 = vadd.f32 %v1509, 1.0
  %v1511 = vrcp.pop %v1510
  %v1512 = vmul.f32 1.0, %v1511
  %1514 = vrot.lane.b32.xlu0 %v1503, 64
  %v1515 = vpop.permute.xlu0 %1514
  %v1517 = vmul.f32 %v1512, %v1515
  %1519 = vrot.lane.b32.xlu0 %v1517, 64
  %v1520 = vpop.permute.xlu0 %1519
  %v1522 = vadd.f32 %v1430, %v1520
  %v1523 = vtanh.pop %v1522
  %v1524 = vsub.f32 1.0, %v1512
  %1526 = vrot.lane.b32.xlu0 %v1523, 96
  %v1527 = vpop.permute.xlu0 %1526
  %v1529 = vmul.f32 %v1524, %v1527
  %v1530 = vmul.f32 %v1512, %v1429
  %v1531 = vadd.f32 %v1529, %v1530
  %v1532 = vmul.f32 %v1531, %v64
  %v1533 = vsel %vm1399, %v1532, 0.0
  %v1534 = vrot.slane %v1533, 4
  %v1535 = vadd.f32 %v1533, %v1534
  %v1536 = vrot.slane %v1535, 2
  %v1537 = vadd.f32 %v1535, %v1536
  %v1538 = vrot.slane %v1537, 1
  %v1539 = vadd.f32 %v1537, %v1538
  %v1540 = vmul.f32 %v1539, 0.5
  %v1541 = vsub.f32 %v1532, %v1540
  %v1542 = vmul.f32 %v1541, %v1541
  %v1543 = vmul.f32 %v1542, %v64
  %v1544 = vsel %vm1399, %v1543, 0.0
  %v1545 = vrot.slane %v1544, 4
  %v1546 = vadd.f32 %v1544, %v1545
  %v1547 = vrot.slane %v1546, 2
  %v1548 = vadd.f32 %v1546, %v1547
  %v1549 = vrot.slane %v1548, 1
  %v1550 = vadd.f32 %v1548, %v1549
  %v1551 = vmul.f32 %v1550, 0.5
  %v1552 = vadd.f32 %v1551, 1e-05
  %v1553 = vrsqrt.pop %v1552
  %v1554 = vmul.f32 %v1541, %v1553
  %v1555 = vmul.f32 %v1554, %v1423
  %v1556 = vadd.f32 %v1555, %v1427
  %v1557 = vadd.f32 %v1156, %v1245
  %1559 = vrot.lane.b32.xlu0 %v1556, 96
  %v1560 = vpop.permute.xlu0 %1559
  %v1561 = vsel %vm69, %v1560, 0
  %1563 = vmatprep.subr.mxu0 0.0
  %1564 = vmatpush1.msra.mxu0 %v31
  %1565 = vmatprep.subr.mxu0 0.0
  %1566 = vmatpush1.msra.mxu0 %v32
  %1567 = vmatprep.subr.mxu0 0.0
  %1568 = vmatpush1.msra.mxu0 %v33
  %1569 = vmatprep.subr.mxu0 0.0
  %1570 = vmatpush1.msra.mxu0 %v34
  %1571 = vmatprep.subr.mxu0 0.0
  %1572 = vmatpush1.msra.mxu0 0.0
  %1573 = vmatprep.subr.mxu0 0.0
  %1574 = vmatpush1.msra.mxu0 0.0
  %1575 = vmatprep.subr.mxu0 0.0
  %1576 = vmatpush1.msra.mxu0 0.0
  %1577 = vmatprep.subr.mxu0 0.0
  %1578 = vmatpush1.msra.mxu0 0.0
  %1579 = vmatprep.subr.mxu0 0.0
  %1580 = vmatpush1.msra.mxu0 0.0
  %1581 = vmatprep.subr.mxu0 0.0
  %1582 = vmatpush1.msra.mxu0 0.0
  %1583 = vmatprep.subr.mxu0 0.0
  %1584 = vmatpush1.msra.mxu0 0.0
  %1585 = vmatprep.subr.mxu0 0.0
  %1586 = vmatpush1.msra.mxu0 0.0
  %1587 = vmatprep.subr.mxu0 0.0
  %1588 = vmatpush1.msra.mxu0 0.0
  %1589 = vmatprep.subr.mxu0 0.0
  %1590 = vmatpush1.msra.mxu0 0.0
  %1591 = vmatprep.subr.mxu0 0.0
  %1592 = vmatpush1.msra.mxu0 0.0
  %1593 = vmatprep.subr.mxu0 0.0
  %1594 = vmatpush1.msra.mxu0 0.0
  %1595 = vmatprep.subr.mxu0 0.0
  %1596 = vmatpush1.msra.mxu0 0.0
  %1597 = vmatprep.subr.mxu0 0.0
  %1598 = vmatpush1.msra.mxu0 0.0
  %1599 = vmatprep.subr.mxu0 0.0
  %1600 = vmatpush1.msra.mxu0 0.0
  %1601 = vmatprep.subr.mxu0 0.0
  %1602 = vmatpush1.msra.mxu0 0.0
  %1603 = vmatprep.subr.mxu0 0.0
  %1604 = vmatpush1.msra.mxu0 0.0
  %1605 = vmatprep.subr.mxu0 0.0
  %1606 = vmatpush1.msra.mxu0 0.0
  %1607 = vmatprep.subr.mxu0 0.0
  %1608 = vmatpush1.msra.mxu0 0.0
  %1609 = vmatprep.subr.mxu0 0.0
  %1610 = vmatpush1.msra.mxu0 0.0
  %1611 = vmatprep.subr.mxu0 0.0
  %1612 = vmatpush1.msra.mxu0 0.0
  %1613 = vmatprep.subr.mxu0 0.0
  %1614 = vmatpush1.msra.mxu0 0.0
  %1615 = vmatprep.subr.mxu0 0.0
  %1616 = vmatpush1.msra.mxu0 0.0
  %1617 = vmatprep.subr.mxu0 0.0
  %1618 = vmatpush1.msra.mxu0 0.0
  %1619 = vmatprep.subr.mxu0 0.0
  %1620 = vmatpush1.msra.mxu0 0.0
  %1621 = vmatprep.subr.mxu0 0.0
  %1622 = vmatpush1.msra.mxu0 0.0
  %1623 = vmatprep.subr.mxu0 0.0
  %1624 = vmatpush1.msra.mxu0 0.0
  %1625 = vmatprep.subr.mxu0 0.0
  %1626 = vmatpush1.msra.mxu0 0.0
  %1627 = vmatprep.mubr.f32.mxu0 0.0
  %1628 = vmatmul.mubr.f32.gmra.mrb[0].mxu0 %v1561
  %v1629 = vpop.f32.mrb[0].mxu0
  %v1630 = vadd.f32 %v1293, %v1629
  %v1631 = vpop.f32.mrb[0].mxu0
  %1632 = vdwg.mxu0
  %v1633 = vadd.f32 %v1557, %v1630
  %v1634 = vxor.u32 %v1633, 2147483648
  %v1635 = vmul.f32 %v1634, 1.442695
  %v1636 = vpow.pop %v1635
  %v1637 = vadd.f32 %v1636, 1.0
  %v1638 = vrcp.pop %v1637
  %v1639 = vmul.f32 1.0, %v1638
  %1641 = vrot.lane.b32.xlu0 %v1630, 64
  %v1642 = vpop.permute.xlu0 %1641
  %v1644 = vmul.f32 %v1639, %v1642
  %1646 = vrot.lane.b32.xlu0 %v1644, 64
  %v1647 = vpop.permute.xlu0 %1646
  %v1649 = vadd.f32 %v1557, %v1647
  %v1650 = vtanh.pop %v1649
  %v1651 = vsub.f32 1.0, %v1639
  %1653 = vrot.lane.b32.xlu0 %v1650, 96
  %v1654 = vpop.permute.xlu0 %1653
  %v1656 = vmul.f32 %v1651, %v1654
  %v1657 = vmul.f32 %v1639, %v1556
  %v1658 = vadd.f32 %v1656, %v1657
  %v1659 = vmul.f32 %v1658, %v64
  %v1660 = vsel %vm1399, %v1659, 0.0
  %v1661 = vrot.slane %v1660, 4
  %v1662 = vadd.f32 %v1660, %v1661
  %v1663 = vrot.slane %v1662, 2
  %v1664 = vadd.f32 %v1662, %v1663
  %v1665 = vrot.slane %v1664, 1
  %v1666 = vadd.f32 %v1664, %v1665
  %v1667 = vmul.f32 %v1666, 0.5
  %v1668 = vsub.f32 %v1659, %v1667
  %v1669 = vmul.f32 %v1668, %v1668
  %v1670 = vmul.f32 %v1669, %v64
  %v1671 = vsel %vm1399, %v1670, 0.0
  %v1672 = vrot.slane %v1671, 4
  %v1673 = vadd.f32 %v1671, %v1672
  %v1674 = vrot.slane %v1673, 2
  %v1675 = vadd.f32 %v1673, %v1674
  %v1676 = vrot.slane %v1675, 1
  %v1677 = vadd.f32 %v1675, %v1676
  %v1678 = vmul.f32 %v1677, 0.5
  %v1679 = vadd.f32 %v1678, 1e-05
  %v1680 = vrsqrt.pop %v1679
  %v1681 = vmul.f32 %v1668, %v1680
  %v1682 = vmul.f32 %v1681, %v1423
  %v1683 = vadd.f32 %v1682, %v1427
  %v1684 = vadd.f32 %v1161, %v1245
  %1686 = vrot.lane.b32.xlu0 %v1683, 96
  %v1687 = vpop.permute.xlu0 %1686
  %v1688 = vsel %vm69, %v1687, 0
  %1690 = vmatprep.subr.mxu0 0.0
  %1691 = vmatpush1.msra.mxu0 %v31
  %1692 = vmatprep.subr.mxu0 0.0
  %1693 = vmatpush1.msra.mxu0 %v32
  %1694 = vmatprep.subr.mxu0 0.0
  %1695 = vmatpush1.msra.mxu0 %v33
  %1696 = vmatprep.subr.mxu0 0.0
  %1697 = vmatpush1.msra.mxu0 %v34
  %1698 = vmatprep.subr.mxu0 0.0
  %1699 = vmatpush1.msra.mxu0 0.0
  %1700 = vmatprep.subr.mxu0 0.0
  %1701 = vmatpush1.msra.mxu0 0.0
  %1702 = vmatprep.subr.mxu0 0.0
  %1703 = vmatpush1.msra.mxu0 0.0
  %1704 = vmatprep.subr.mxu0 0.0
  %1705 = vmatpush1.msra.mxu0 0.0
  %1706 = vmatprep.subr.mxu0 0.0
  %1707 = vmatpush1.msra.mxu0 0.0
  %1708 = vmatprep.subr.mxu0 0.0
  %1709 = vmatpush1.msra.mxu0 0.0
  %1710 = vmatprep.subr.mxu0 0.0
  %1711 = vmatpush1.msra.mxu0 0.0
  %1712 = vmatprep.subr.mxu0 0.0
  %1713 = vmatpush1.msra.mxu0 0.0
  %1714 = vmatprep.subr.mxu0 0.0
  %1715 = vmatpush1.msra.mxu0 0.0
  %1716 = vmatprep.subr.mxu0 0.0
  %1717 = vmatpush1.msra.mxu0 0.0
  %1718 = vmatprep.subr.mxu0 0.0
  %1719 = vmatpush1.msra.mxu0 0.0
  %1720 = vmatprep.subr.mxu0 0.0
  %1721 = vmatpush1.msra.mxu0 0.0
  %1722 = vmatprep.subr.mxu0 0.0
  %1723 = vmatpush1.msra.mxu0 0.0
  %1724 = vmatprep.subr.mxu0 0.0
  %1725 = vmatpush1.msra.mxu0 0.0
  %1726 = vmatprep.subr.mxu0 0.0
  %1727 = vmatpush1.msra.mxu0 0.0
  %1728 = vmatprep.subr.mxu0 0.0
  %1729 = vmatpush1.msra.mxu0 0.0
  %1730 = vmatprep.subr.mxu0 0.0
  %1731 = vmatpush1.msra.mxu0 0.0
  %1732 = vmatprep.subr.mxu0 0.0
  %1733 = vmatpush1.msra.mxu0 0.0
  %1734 = vmatprep.subr.mxu0 0.0
  %1735 = vmatpush1.msra.mxu0 0.0
  %1736 = vmatprep.subr.mxu0 0.0
  %1737 = vmatpush1.msra.mxu0 0.0
  %1738 = vmatprep.subr.mxu0 0.0
  %1739 = vmatpush1.msra.mxu0 0.0
  %1740 = vmatprep.subr.mxu0 0.0
  %1741 = vmatpush1.msra.mxu0 0.0
  %1742 = vmatprep.subr.mxu0 0.0
  %1743 = vmatpush1.msra.mxu0 0.0
  %1744 = vmatprep.subr.mxu0 0.0
  %1745 = vmatpush1.msra.mxu0 0.0
  %1746 = vmatprep.subr.mxu0 0.0
  %1747 = vmatpush1.msra.mxu0 0.0
  %1748 = vmatprep.subr.mxu0 0.0
  %1749 = vmatpush1.msra.mxu0 0.0
  %1750 = vmatprep.subr.mxu0 0.0
  %1751 = vmatpush1.msra.mxu0 0.0
  %1752 = vmatprep.subr.mxu0 0.0
  %1753 = vmatpush1.msra.mxu0 0.0
  %1754 = vmatprep.mubr.f32.mxu0 0.0
  %1755 = vmatmul.mubr.f32.gmra.mrb[0].mxu0 %v1688
  %v1756 = vpop.f32.mrb[0].mxu0
  %v1757 = vadd.f32 %v1293, %v1756
  %v1758 = vpop.f32.mrb[0].mxu0
  %1759 = vdwg.mxu0
  %v1760 = vadd.f32 %v1684, %v1757
  %v1761 = vxor.u32 %v1760, 2147483648
  %v1762 = vmul.f32 %v1761, 1.442695
  %v1763 = vpow.pop %v1762
  %v1764 = vadd.f32 %v1763, 1.0
  %v1765 = vrcp.pop %v1764
  %v1766 = vmul.f32 1.0, %v1765
  %1768 = vrot.lane.b32.xlu0 %v1757, 64
  %v1769 = vpop.permute.xlu0 %1768
  %v1771 = vmul.f32 %v1766, %v1769
  %1773 = vrot.lane.b32.xlu0 %v1771, 64
  %v1774 = vpop.permute.xlu0 %1773
  %v1776 = vadd.f32 %v1684, %v1774
  %v1777 = vtanh.pop %v1776
  %v1778 = vsub.f32 1.0, %v1766
  %1780 = vrot.lane.b32.xlu0 %v1777, 96
  %v1781 = vpop.permute.xlu0 %1780
  %v1783 = vmul.f32 %v1778, %v1781
  %v1784 = vmul.f32 %v1766, %v1683
  %v1785 = vadd.f32 %v1783, %v1784
  %v1786 = vmul.f32 %v1785, %v64
  %v1787 = vsel %vm1399, %v1786, 0.0
  %v1788 = vrot.slane %v1787, 4
  %v1789 = vadd.f32 %v1787, %v1788
  %v1790 = vrot.slane %v1789, 2
  %v1791 = vadd.f32 %v1789, %v1790
  %v1792 = vrot.slane %v1791, 1
  %v1793 = vadd.f32 %v1791, %v1792
  %v1794 = vmul.f32 %v1793, 0.5
  %v1795 = vsub.f32 %v1786, %v1794
  %v1796 = vmul.f32 %v1795, %v1795
  %v1797 = vmul.f32 %v1796, %v64
  %v1798 = vsel %vm1399, %v1797, 0.0
  %v1799 = vrot.slane %v1798, 4
  %v1800 = vadd.f32 %v1798, %v1799
  %v1801 = vrot.slane %v1800, 2
  %v1802 = vadd.f32 %v1800, %v1801
  %v1803 = vrot.slane %v1802, 1
  %v1804 = vadd.f32 %v1802, %v1803
  %v1805 = vmul.f32 %v1804, 0.5
  %v1806 = vadd.f32 %v1805, 1e-05
  %v1807 = vrsqrt.pop %v1806
  %v1808 = vmul.f32 %v1795, %v1807
  %v1809 = vmul.f32 %v1808, %v1423
  %v1810 = vadd.f32 %v1809, %v1427
  %v1811 = vadd.f32 %v1166, %v1245
  %1813 = vrot.lane.b32.xlu0 %v1810, 96
  %v1814 = vpop.permute.xlu0 %1813
  %v1815 = vsel %vm69, %v1814, 0
  %1817 = vmatprep.subr.mxu0 0.0
  %1818 = vmatpush1.msra.mxu0 %v31
  %1819 = vmatprep.subr.mxu0 0.0
  %1820 = vmatpush1.msra.mxu0 %v32
  %1821 = vmatprep.subr.mxu0 0.0
  %1822 = vmatpush1.msra.mxu0 %v33
  %1823 = vmatprep.subr.mxu0 0.0
  %1824 = vmatpush1.msra.mxu0 %v34
  %1825 = vmatprep.subr.mxu0 0.0
  %1826 = vmatpush1.msra.mxu0 0.0
  %1827 = vmatprep.subr.mxu0 0.0
  %1828 = vmatpush1.msra.mxu0 0.0
  %1829 = vmatprep.subr.mxu0 0.0
  %1830 = vmatpush1.msra.mxu0 0.0
  %1831 = vmatprep.subr.mxu0 0.0
  %1832 = vmatpush1.msra.mxu0 0.0
  %1833 = vmatprep.subr.mxu0 0.0
  %1834 = vmatpush1.msra.mxu0 0.0
  %1835 = vmatprep.subr.mxu0 0.0
  %1836 = vmatpush1.msra.mxu0 0.0
  %1837 = vmatprep.subr.mxu0 0.0
  %1838 = vmatpush1.msra.mxu0 0.0
  %1839 = vmatprep.subr.mxu0 0.0
  %1840 = vmatpush1.msra.mxu0 0.0
  %1841 = vmatprep.subr.mxu0 0.0
  %1842 = vmatpush1.msra.mxu0 0.0
  %1843 = vmatprep.subr.mxu0 0.0
  %1844 = vmatpush1.msra.mxu0 0.0
  %1845 = vmatprep.subr.mxu0 0.0
  %1846 = vmatpush1.msra.mxu0 0.0
  %1847 = vmatprep.subr.mxu0 0.0
  %1848 = vmatpush1.msra.mxu0 0.0
  %1849 = vmatprep.subr.mxu0 0.0
  %1850 = vmatpush1.msra.mxu0 0.0
  %1851 = vmatprep.subr.mxu0 0.0
  %1852 = vmatpush1.msra.mxu0 0.0
  %1853 = vmatprep.subr.mxu0 0.0
  %1854 = vmatpush1.msra.mxu0 0.0
  %1855 = vmatprep.subr.mxu0 0.0
  %1856 = vmatpush1.msra.mxu0 0.0
  %1857 = vmatprep.subr.mxu0 0.0
  %1858 = vmatpush1.msra.mxu0 0.0
  %1859 = vmatprep.subr.mxu0 0.0
  %1860 = vmatpush1.msra.mxu0 0.0
  %1861 = vmatprep.subr.mxu0 0.0
  %1862 = vmatpush1.msra.mxu0 0.0
  %1863 = vmatprep.subr.mxu0 0.0
  %1864 = vmatpush1.msra.mxu0 0.0
  %1865 = vmatprep.subr.mxu0 0.0
  %1866 = vmatpush1.msra.mxu0 0.0
  %1867 = vmatprep.subr.mxu0 0.0
  %1868 = vmatpush1.msra.mxu0 0.0
  %1869 = vmatprep.subr.mxu0 0.0
  %1870 = vmatpush1.msra.mxu0 0.0
  %1871 = vmatprep.subr.mxu0 0.0
  %1872 = vmatpush1.msra.mxu0 0.0
  %1873 = vmatprep.subr.mxu0 0.0
  %1874 = vmatpush1.msra.mxu0 0.0
  %1875 = vmatprep.subr.mxu0 0.0
  %1876 = vmatpush1.msra.mxu0 0.0
  %1877 = vmatprep.subr.mxu0 0.0
  %1878 = vmatpush1.msra.mxu0 0.0
  %1879 = vmatprep.subr.mxu0 0.0
  %1880 = vmatpush1.msra.mxu0 0.0
  %1881 = vmatprep.mubr.f32.mxu0 0.0
  %1882 = vmatmul.mubr.f32.gmra.mrb[0].mxu0 %v1815
  %v1883 = vpop.f32.mrb[0].mxu0
  %v1884 = vadd.f32 %v1293, %v1883
  %v1885 = vpop.f32.mrb[0].mxu0
  %1886 = vdwg.mxu0
  %v1887 = vadd.f32 %v1811, %v1884
  %v1888 = vxor.u32 %v1887, 2147483648
  %v1889 = vmul.f32 %v1888, 1.442695
  %v1890 = vpow.pop %v1889
  %v1891 = vadd.f32 %v1890, 1.0
  %v1892 = vrcp.pop %v1891
  %v1893 = vmul.f32 1.0, %v1892
  %1895 = vrot.lane.b32.xlu0 %v1884, 64
  %v1896 = vpop.permute.xlu0 %1895
  %v1898 = vmul.f32 %v1893, %v1896
  %1900 = vrot.lane.b32.xlu0 %v1898, 64
  %v1901 = vpop.permute.xlu0 %1900
  %v1903 = vadd.f32 %v1811, %v1901
  %v1904 = vtanh.pop %v1903
  %v1905 = vsub.f32 1.0, %v1893
  %1907 = vrot.lane.b32.xlu0 %v1904, 96
  %v1908 = vpop.permute.xlu0 %1907
  %v1910 = vmul.f32 %v1905, %v1908
  %v1911 = vmul.f32 %v1893, %v1810
  %v1912 = vadd.f32 %v1910, %v1911
  %v1913 = vmul.f32 %v1912, %v64
  %v1914 = vlaneseq
  %v1915 = vshrl.u32 %v1914, 7
  %v1916 = vsub.s32 0, %v1915
  %v1917 = vrot.slane %v42, %v1916
  %1923 = vrot.lane.b32.xlu0 %v1398, 96
  %v1924 = vpop.permute.xlu0 %1923
  %1925 = vrot.lane.b32.xlu0 %v1532, 96
  %v1926 = vpop.permute.xlu0 %1925
  %1927 = vrot.lane.b32.xlu0 %v1659, 96
  %v1928 = vpop.permute.xlu0 %1927
  %1929 = vrot.lane.b32.xlu0 %v1786, 96
  %v1930 = vpop.permute.xlu0 %1929
  %1931 = vrot.lane.b32.xlu0 %v1913, 96
  %v1932 = vpop.permute.xlu0 %1931
  %v1933 = vsel %vm69, %v1924, 0
  %v1935 = vsel %vm69, %v1926, 0
  %v1937 = vsel %vm69, %v1928, 0
  %v1939 = vsel %vm69, %v1930, 0
  %v1941 = vsel %vm69, %v1932, 0
  %1943 = vmatprep.subr.mxu0 0.0
  %1944 = vmatpush1.msra.mxu0 %v35
  %1945 = vmatprep.subr.mxu0 0.0
  %1946 = vmatpush1.msra.mxu0 %v36
  %1947 = vmatprep.subr.mxu0 0.0
  %1948 = vmatpush1.msra.mxu0 %v37
  %1949 = vmatprep.subr.mxu0 0.0
  %1950 = vmatpush1.msra.mxu0 %v38
  %1951 = vmatprep.subr.mxu0 0.0
  %1952 = vmatpush1.msra.mxu0 0.0
  %1953 = vmatprep.subr.mxu0 0.0
  %1954 = vmatpush1.msra.mxu0 0.0
  %1955 = vmatprep.subr.mxu0 0.0
  %1956 = vmatpush1.msra.mxu0 0.0
  %1957 = vmatprep.subr.mxu0 0.0
  %1958 = vmatpush1.msra.mxu0 0.0
  %1959 = vmatprep.subr.mxu0 0.0
  %1960 = vmatpush1.msra.mxu0 0.0
  %1961 = vmatprep.subr.mxu0 0.0
  %1962 = vmatpush1.msra.mxu0 0.0
  %1963 = vmatprep.subr.mxu0 0.0
  %1964 = vmatpush1.msra.mxu0 0.0
  %1965 = vmatprep.subr.mxu0 0.0
  %1966 = vmatpush1.msra.mxu0 0.0
  %1967 = vmatprep.subr.mxu0 0.0
  %1968 = vmatpush1.msra.mxu0 0.0
  %1969 = vmatprep.subr.mxu0 0.0
  %1970 = vmatpush1.msra.mxu0 0.0
  %1971 = vmatprep.subr.mxu0 0.0
  %1972 = vmatpush1.msra.mxu0 0.0
  %1973 = vmatprep.subr.mxu0 0.0
  %1974 = vmatpush1.msra.mxu0 0.0
  %1975 = vmatprep.subr.mxu0 0.0
  %1976 = vmatpush1.msra.mxu0 0.0
  %1977 = vmatprep.subr.mxu0 0.0
  %1978 = vmatpush1.msra.mxu0 0.0
  %1979 = vmatprep.subr.mxu0 0.0
  %1980 = vmatpush1.msra.mxu0 0.0
  %1981 = vmatprep.subr.mxu0 0.0
  %1982 = vmatpush1.msra.mxu0 0.0
  %1983 = vmatprep.subr.mxu0 0.0
  %1984 = vmatpush1.msra.mxu0 0.0
  %1985 = vmatprep.subr.mxu0 0.0
  %1986 = vmatpush1.msra.mxu0 0.0
  %1987 = vmatprep.subr.mxu0 0.0
  %1988 = vmatpush1.msra.mxu0 0.0
  %1989 = vmatprep.subr.mxu0 0.0
  %1990 = vmatpush1.msra.mxu0 0.0
  %1991 = vmatprep.subr.mxu0 0.0
  %1992 = vmatpush1.msra.mxu0 0.0
  %1993 = vmatprep.subr.mxu0 0.0
  %1994 = vmatpush1.msra.mxu0 0.0
  %1995 = vmatprep.subr.mxu0 0.0
  %1996 = vmatpush1.msra.mxu0 0.0
  %1997 = vmatprep.subr.mxu0 0.0
  %1998 = vmatpush1.msra.mxu0 0.0
  %1999 = vmatprep.subr.mxu0 0.0
  %2000 = vmatpush1.msra.mxu0 0.0
  %2001 = vmatprep.subr.mxu0 0.0
  %2002 = vmatpush1.msra.mxu0 0.0
  %2003 = vmatprep.subr.mxu0 0.0
  %2004 = vmatpush1.msra.mxu0 0.0
  %2005 = vmatprep.subr.mxu0 0.0
  %2006 = vmatpush1.msra.mxu0 0.0
  %2007 = vmatprep.mubr.f32.mxu0 0.0
  %2008 = vmatmul.mubr.f32.gmra.mrb[0].mxu0 %v1933
  %v2009 = vpop.f32.mrb[0].mxu0
  %v2010 = vadd.f32 %v1917, %v2009
  %v2011 = vpop.f32.mrb[0].mxu0
  %2012 = vmatprep.mubr.f32.mxu0 0.0
  %2013 = vmatmul.mubr.f32.gmra.mrb[0].mxu0 %v1935
  %v2014 = vpop.f32.mrb[0].mxu0
  %v2015 = vadd.f32 %v1917, %v2014
  %v2016 = vpop.f32.mrb[0].mxu0
  %2017 = vmatprep.mubr.f32.mxu0 0.0
  %2018 = vmatmul.mubr.f32.gmra.mrb[0].mxu0 %v1937
  %v2019 = vpop.f32.mrb[0].mxu0
  %v2020 = vadd.f32 %v1917, %v2019
  %v2021 = vpop.f32.mrb[0].mxu0
  %2022 = vmatprep.mubr.f32.mxu0 0.0
  %2023 = vmatmul.mubr.f32.gmra.mrb[0].mxu0 %v1939
  %v2024 = vpop.f32.mrb[0].mxu0
  %v2025 = vadd.f32 %v1917, %v2024
  %v2026 = vpop.f32.mrb[0].mxu0
  %2027 = vmatprep.mubr.f32.mxu0 0.0
  %2028 = vmatmul.mubr.f32.gmra.mrb[0].mxu0 %v1941
  %v2029 = vpop.f32.mrb[0].mxu0
  %v2030 = vadd.f32 %v1917, %v2029
  %v2031 = vpop.f32.mrb[0].mxu0
  %2032 = vdwg.mxu0
  %2033 = vst [vmem:[%s2] sm:$0xff] %v2010
  %2034 = vst [vmem:[%s2 + $0x8] sm:$0xff] %v2015
  %2035 = vst [vmem:[%s2 + $0x10] sm:$0xff] %v2020
  %2036 = vst [vmem:[%s2 + $0x18] sm:$0xff] %v2025
  %2037 = vst [vmem:[%s2 + $0x20] sm:$0xff] %v2030
  %2038 = vst [vmem:[%s2 + $0x28] sm:$0xff] 0.0
  %2040 = vst.msk [vmem:[%s2 + $0x28] sm:$0xff] %vm69, %v1932
  // Predicated region
  $region10: #{neural_parser_forward_device.1} parent=0 // pred_check
    _
  $region11: #{neural_parser_forward_device.1} parent=0 // pred_check_branch
    %2042 = sbr.rel (0) target = $region13
  $region12: #{neural_parser_forward_device.1} parent=0 // pred_region
    _
  $region13: #{neural_parser_forward_device.1} parent=0 // pred_fallthru
    _
  // Predicated region
  $region14: #{neural_parser_forward_device.1} parent=0 // pred_check
    _
  $region15: #{neural_parser_forward_device.1} parent=0 // pred_check_branch
    %2044 = sbr.rel (0) target = $region17
  $region16: #{neural_parser_forward_device.1} parent=0 // pred_region
    _
  $region17: #{neural_parser_forward_device.1} parent=0 // pred_fallthru
    _

</llo_original>
